<compile_context>
chip_gen: v5e
topology: v5e:2x2
jax: 0.10.0
libtpu: 0.0.40
codegen_flags: <defaults>
</compile_context>

<pallas_src>
import functools

import jax
import jax.numpy as jnp
from jax import lax
from jax.experimental import pallas as pl
from jax.experimental.pallas import tpu as pltpu

SIG_LEN = 2250 * 12                    # hard-coded in the PyTorch module (decoder out + .view(-1, 12, 2250))
TILE_N = 6912                          # lane tile for the SIG_LEN axis (multiple of 128)
N_TILES = pl.cdiv(SIG_LEN, TILE_N)     # 4 (even -> balanced across 2 TCs on v7x)
SIG_PAD = N_TILES * TILE_N             # 27648 (pad sliced off outside the kernel)


# --------------------------------------------------------------------------------------
# Call A: VQ front-end (to_latent, distances, argmin, codebook gather, VQ loss,
#         decoder[0] Linear + ReLU).  Tiny; runs once with everything in VMEM.
# --------------------------------------------------------------------------------------
def _vq_frontend_kernel(feat_ref, e2_ref, lat_w_ref, lat_b_ref, emb_ref, d1w_ref, d1b_ref,
                        h_ref, idx_ref, vq_ref, *, commitment_cost, b_valid):
    f32 = jnp.float32
    feat = feat_ref[...]                                     # (Bp, Denc)
    emb = emb_ref[...]                                       # (K, Dlat) codebook, f32
    k = emb.shape[0]
    lat_dim = emb.shape[1]

    # to_latent: z = features @ W + b
    z = jnp.dot(feat, lat_w_ref[...], preferred_element_type=f32) + lat_b_ref[...]       # (Bp, Dlat)

    # distances up to the per-row constant ||z||^2 (does not affect argmin):
    #   d(i, k) = ||e_k||^2 - 2 z_i . e_k
    ze = lax.dot_general(z, emb, (((1,), (1,)), ((), ())),
                         preferred_element_type=f32)                                     # (Bp, K)
    d2 = e2_ref[...] - 2.0 * ze                                                          # (Bp, K)

    min_d = jnp.min(d2, axis=1, keepdims=True)                                           # (Bp, 1)
    iota = lax.broadcasted_iota(jnp.int32, d2.shape, 1)                                  # (Bp, K)
    # first index achieving the minimum (matches torch.argmin tie-breaking)
    idx = jnp.min(jnp.where(d2 <= min_d, iota, jnp.int32(k)), axis=1, keepdims=True)     # (Bp, 1)
    onehot = (iota == idx).astype(f32)                                                   # (Bp, K)
    zq = jnp.dot(onehot, emb, preferred_element_type=f32)                                # (Bp, Dlat)

    # mask out padded batch rows for the loss
    row_ids = lax.broadcasted_iota(jnp.int32, (z.shape[0], 1), 0)
    row_mask = (row_ids < b_valid).astype(f32)                                           # (Bp, 1)

    # Forward value: e_latent_loss == q_latent_loss == mse(zq, z) (detach only affects grads).
    vq_sse = jnp.sum(jnp.sum((zq - z) ** 2, axis=1, keepdims=True) * row_mask,
                     axis=0, keepdims=True)                                              # (1, 1)
    vq_ref[...] = (1.0 + commitment_cost) * vq_sse / jnp.float32(b_valid * lat_dim)

    # decoder first layer + ReLU; store already in bf16 so the per-tile body is pure MXU
    h = jnp.maximum(jnp.dot(zq, d1w_ref[...], preferred_element_type=f32) + d1b_ref[...], 0.0)
    h_ref[...] = h.astype(jnp.bfloat16)                                                  # (Bp, Denc)
    idx_ref[...] = idx


# --------------------------------------------------------------------------------------
# Call B: streamed decoder[2] matmul over SIG_LEN tiles (parallel grid axis).
# --------------------------------------------------------------------------------------
def _decoder_tile_kernel(h_ref, x_ref, d2w_ref, d2b_ref, xrec_ref, sse_ref, *, b_valid):
    f32 = jnp.float32
    # (Bp, Denc)bf16 @ (Denc, TILE_N)bf16 -> f32 accumulation on the MXU
    xr = jnp.dot(h_ref[...], d2w_ref[0], preferred_element_type=f32) + d2b_ref[...]      # (Bp, TILE_N)
    xrec_ref[...] = xr

    diff = xr - x_ref[...]                                   # padded SIG columns are 0 - 0
    row_ids = lax.broadcasted_iota(jnp.int32, (diff.shape[0], 1), 0)
    row_mask = (row_ids < b_valid).astype(f32)               # mask padded batch rows
    sse = jnp.sum(jnp.sum(diff * diff, axis=1, keepdims=True) * row_mask)                # scalar
    # per-tile partial SSE, broadcast into a lane/sublane-aligned (1, 8, 128) block
    sse_ref[...] = jnp.broadcast_to(sse, sse_ref.shape)


def encoder_vqvae_forward(params, x, *, commitment_cost=0.1):
    """Replicates EncoderVQVAEFixed.forward: returns (x_recon, total_loss, vq_loss, indices)."""
    b = x.shape[0]
    x_flat = x.reshape(b, -1).astype(jnp.float32)            # (B, 27000)

    # TODO(synk): the real pretrained ST-MEM encoder (forward_encoding) is not provided; stubbed
    # here (outside the Pallas kernels, like the torch.no_grad glue) as a frozen bf16 linear + tanh.
    # TODO(synk): fusing this stub's SIG_LEN reduction into the streamed x tiles would remove the
    # duplicate x HBM read, but conflicts with the fully-parallel tile axis; left separate.
    features = jnp.tanh(
        jnp.dot(x_flat.astype(jnp.bfloat16), params["enc_w"],
                preferred_element_type=jnp.float32) + params["enc_b"])                   # (B, Denc)

    # pad batch to a sublane multiple and the signal axis to the tile size
    b_pad = ((b + 7) // 8) * 8
    feat_pad = jnp.pad(features, ((0, b_pad - b), (0, 0)))
    x_pad = jnp.pad(x_flat, ((0, b_pad - b), (0, SIG_PAD - SIG_LEN)))

    denc = params["lat_w"].shape[0]
    dlat = params["lat_w"].shape[1]

    # ---------------- Call A: VQ front-end (one shot, whole arrays in VMEM) ----------------
    h_bf, idx, vq = pl.pallas_call(
        functools.partial(_vq_frontend_kernel, commitment_cost=commitment_cost, b_valid=b),
        out_shape=(
            jax.ShapeDtypeStruct((b_pad, denc), jnp.bfloat16),   # h = ReLU(zq @ Wd1 + b)
            jax.ShapeDtypeStruct((b_pad, 1), jnp.int32),         # encoding_indices
            jax.ShapeDtypeStruct((1, 1), jnp.float32),           # vq_loss
        ),
    )(feat_pad, params["emb_sq"], params["lat_w"], params["lat_b"],
      params["emb"], params["dec1_w"], params["dec1_b"])

    # ---------------- Call B: streamed decoder output + per-tile partial SSE ----------------
    const = lambda shape: pl.BlockSpec(shape, lambda n: (0, 0))      # resident across the grid
    tiled = lambda shape: pl.BlockSpec(shape, lambda n: (0, n))      # streamed along SIG_LEN

    xrec_pad, sse_part = pl.pallas_call(
        functools.partial(_decoder_tile_kernel, b_valid=b),
        out_shape=(
            jax.ShapeDtypeStruct((b_pad, SIG_PAD), jnp.float32),     # x_recon (padded, flat)
            jax.ShapeDtypeStruct((N_TILES, 8, 128), jnp.float32),    # per-tile partial SSE
        ),
        grid_spec=pltpu.PrefetchScalarGridSpec(
            num_scalar_prefetch=0,
            grid=(N_TILES,),
            in_specs=[
                const((b_pad, denc)),                                # h (bf16, resident)
                tiled((b_pad, TILE_N)),                              # x (flat, padded)
                pl.BlockSpec((1, denc, TILE_N), lambda n: (n, 0, 0)),  # dec2_w slab (bf16, contiguous)
                tiled((1, TILE_N)),                                  # dec2_b (padded)
            ],
            out_specs=(
                tiled((b_pad, TILE_N)),                              # x_recon tile
                pl.BlockSpec((1, 8, 128), lambda n: (n, 0, 0)),      # partial SSE tile
            ),
        ),
        compiler_params=pltpu.CompilerParams(
            dimension_semantics=("parallel",),       # no carried state -> v7x 2-TC split is safe
            vmem_limit_bytes=32 * 1024 * 1024,       # actual live footprint is ~3 MiB
        ),
    )(h_bf, x_pad, params["dec2_w"], params["dec2_b"])

    recon_loss = jnp.sum(sse_part[:, 0, 0]) / jnp.float32(b * SIG_LEN)
    vq_loss = vq[0, 0]
    total_loss = recon_loss + vq_loss

    x_recon = xrec_pad[:b, :SIG_LEN].reshape(b, 12, 2250)
    return x_recon, total_loss, vq_loss, idx[:b, 0]


def init_params(key, encoder_dim=64, latent_dim=128, num_embeddings=512):
    """Deterministic synthetic parameters with shapes implied by the module's __init__ (f32)."""
    ks = jax.random.split(key, 9)
    u = lambda k, shape, a: jax.random.uniform(k, shape, jnp.float32, -a, a)
    return {
        # frozen encoder stub (encoder.width == encoder_dim)
        "enc_w": u(ks[0], (SIG_LEN, encoder_dim), 0.01),
        "enc_b": u(ks[1], (1, encoder_dim), 0.01),
        # self.to_latent = nn.Linear(encoder_dim, latent_dim)
        "lat_w": u(ks[2], (encoder_dim, latent_dim), 1.0 / encoder_dim ** 0.5),
        "lat_b": u(ks[3], (1, latent_dim), 1.0 / encoder_dim ** 0.5),
        # VectorQuantizerFixed: torch.rand(num_embeddings, embedding_dim) - 0.5
        "emb": jax.random.uniform(ks[4], (num_embeddings, latent_dim), jnp.float32) - 0.5,
        # decoder: Linear(latent, encoder_dim), ReLU, Linear(encoder_dim, 2250*12)
        "dec1_w": u(ks[5], (latent_dim, encoder_dim), 1.0 / latent_dim ** 0.5),
        "dec1_b": u(ks[6], (1, encoder_dim), 1.0 / latent_dim ** 0.5),
        "dec2_w": u(ks[7], (encoder_dim, SIG_LEN), 1.0 / encoder_dim ** 0.5),
        "dec2_b": u(ks[8], (1, SIG_LEN), 1.0 / encoder_dim ** 0.5),
    }


def prepare_params(raw):
    """One-time (outside jit) kernel prep:
       - pad dec2 to the lane tile, cast dec2_w to bf16 and reshape into contiguous
         per-tile slabs (N_TILES, Denc, TILE_N) so each streamed tile is one HBM transfer,
       - precompute ||e_k||^2,
       - cast the frozen encoder stub weight to bf16 (largest HBM read end-to-end)."""
    pad_n = SIG_PAD - SIG_LEN
    denc = raw["dec2_w"].shape[0]
    p = dict(raw)
    w = jnp.pad(raw["dec2_w"], ((0, 0), (0, pad_n)))                 # (Denc, SIG_PAD)
    p["dec2_w"] = (w.reshape(denc, N_TILES, TILE_N)
                    .transpose(1, 0, 2)                              # (N_TILES, Denc, TILE_N)
                    .astype(jnp.bfloat16))
    p["dec2_b"] = jnp.pad(raw["dec2_b"], ((0, 0), (0, pad_n))).astype(jnp.float32)
    p["emb_sq"] = jnp.sum(raw["emb"].astype(jnp.float32) ** 2, axis=1)[None, :]   # (1, K)
    p["enc_w"] = raw["enc_w"].astype(jnp.bfloat16)
    return p


if __name__ == "__main__":
    key = jax.random.PRNGKey(0)
    pkey, xkey = jax.random.split(key)
    params = prepare_params(init_params(pkey))

    # Small batch; the 12 x 2250 signal shape is hard-coded by the module.
    x = jax.random.normal(xkey, (2, 12, 2250), jnp.float32)

    fwd = jax.jit(functools.partial(encoder_vqvae_forward, commitment_cost=0.1))
    x_recon, total_loss, vq_loss, indices = fwd(params, x)
    jax.block_until_ready((x_recon, total_loss, vq_loss, indices))

    assert x_recon.shape == (2, 12, 2250)
    assert indices.shape == (2,) and indices.dtype == jnp.int32
    assert total_loss.shape == () and vq_loss.shape == ()
    assert bool(jnp.isfinite(total_loss)) and bool(jnp.isfinite(vq_loss))
    print("KERNEL_OK")
</pallas_src>

<mosaic_0001>
module attributes {stable_mosaic.version = 11 : i64} {
  func.func @_vq_frontend_kernel(%arg0: memref<8x64xf32, #tpu.memory_space<vmem>>, %arg1: memref<1x512xf32, #tpu.memory_space<vmem>>, %arg2: memref<64x128xf32, #tpu.memory_space<vmem>>, %arg3: memref<1x128xf32, #tpu.memory_space<vmem>>, %arg4: memref<512x128xf32, #tpu.memory_space<vmem>>, %arg5: memref<128x64xf32, #tpu.memory_space<vmem>>, %arg6: memref<1x64xf32, #tpu.memory_space<vmem>>, %arg7: memref<8x64xbf16, #tpu.memory_space<vmem>>, %arg8: memref<8x1xi32, #tpu.memory_space<vmem>>, %arg9: memref<1x1xf32, #tpu.memory_space<vmem>>) attributes {dimension_semantics = [], scalar_prefetch = 0 : i64, scratch_operands = 0 : i64, tpu.core_type = #tpu.core_type<tc>} {
    %c0 = arith.constant 0 : index
    %c0_0 = arith.constant 0 : index
    %0 = vector.load %arg0[%c0, %c0_0] : memref<8x64xf32, #tpu.memory_space<vmem>>, vector<8x64xf32>
    %c0_1 = arith.constant 0 : index
    %c0_2 = arith.constant 0 : index
    %1 = vector.load %arg4[%c0_1, %c0_2] : memref<512x128xf32, #tpu.memory_space<vmem>>, vector<512x128xf32>
    %c0_3 = arith.constant 0 : index
    %c0_4 = arith.constant 0 : index
    %2 = vector.load %arg2[%c0_3, %c0_4] : memref<64x128xf32, #tpu.memory_space<vmem>>, vector<64x128xf32>
    %cst = arith.constant dense<0.000000e+00> : vector<8x128xf32>
    %3 = tpu.matmul %0, %2, %cst {dimension_numbers = #tpu.dot_dimension_numbers<[1], [0], [0], [1], [0, 0, 1, 1], [], []>} : vector<8x64xf32>, vector<64x128xf32>, vector<8x128xf32> -> vector<8x128xf32>
    %c0_5 = arith.constant 0 : index
    %c0_6 = arith.constant 0 : index
    %4 = vector.load %arg3[%c0_5, %c0_6] : memref<1x128xf32, #tpu.memory_space<vmem>>, vector<1x128xf32>
    %5 = vector.broadcast %4 : vector<1x128xf32> to vector<8x128xf32>
    %6 = arith.addf %3, %5 : vector<8x128xf32>
    %cst_7 = arith.constant dense<0.000000e+00> : vector<8x512xf32>
    %7 = tpu.matmul %6, %1, %cst_7 {dimension_numbers = #tpu.dot_dimension_numbers<[1], [1], [0], [0], [0, 0, 1, 0], [], []>} : vector<8x128xf32>, vector<512x128xf32>, vector<8x512xf32> -> vector<8x512xf32>
    %c0_8 = arith.constant 0 : index
    %c0_9 = arith.constant 0 : index
    %8 = vector.load %arg1[%c0_8, %c0_9] : memref<1x512xf32, #tpu.memory_space<vmem>>, vector<1x512xf32>
    %cst_10 = arith.constant 2.000000e+00 : f32
    %9 = vector.broadcast %cst_10 : f32 to vector<8x512xf32>
    %10 = arith.mulf %9, %7 : vector<8x512xf32>
    %11 = vector.broadcast %8 : vector<1x512xf32> to vector<8x512xf32>
    %12 = arith.subf %11, %10 : vector<8x512xf32>
    %cst_11 = arith.constant dense<0x7F800000> : vector<8xf32>
    %13 = vector.multi_reduction <minimumf>, %12, %cst_11 [1] : vector<8x512xf32> to vector<8xf32>
    %14 = vector.shape_cast %13 : vector<8xf32> to vector<8x1xf32>
    %15 = tpu.iota {dimensions = array<i32: 1>} : vector<8x512xi32>
    %16 = vector.broadcast %14 : vector<8x1xf32> to vector<8x512xf32>
    %17 = arith.cmpf ole, %12, %16 : vector<8x512xf32>
    %c512_i32 = arith.constant 512 : i32
    %18 = vector.broadcast %c512_i32 : i32 to vector<8x512xi32>
    %19 = arith.select %17, %15, %18 : vector<8x512xi1>, vector<8x512xi32>
    %cst_12 = arith.constant dense<2147483647> : vector<8xi32>
    %20 = vector.multi_reduction <minsi>, %19, %cst_12 [1] : vector<8x512xi32> to vector<8xi32>
    %21 = vector.shape_cast %20 : vector<8xi32> to vector<8x1xi32>
    %22 = vector.broadcast %21 : vector<8x1xi32> to vector<8x512xi32>
    %23 = arith.cmpi eq, %15, %22 : vector<8x512xi32>
    %24 = arith.extui %23 : vector<8x512xi1> to vector<8x512xi32>
    %25 = arith.sitofp %24 : vector<8x512xi32> to vector<8x512xf32>
    %cst_13 = arith.constant dense<0.000000e+00> : vector<8x128xf32>
    %26 = tpu.matmul %25, %1, %cst_13 {dimension_numbers = #tpu.dot_dimension_numbers<[1], [0], [0], [1], [0, 0, 1, 1], [], []>} : vector<8x512xf32>, vector<512x128xf32>, vector<8x128xf32> -> vector<8x128xf32>
    %27 = tpu.iota {dimensions = array<i32: 0>} : vector<8x1xi32>
    %c2_i32 = arith.constant 2 : i32
    %28 = vector.broadcast %c2_i32 : i32 to vector<8x1xi32>
    %29 = arith.cmpi slt, %27, %28 : vector<8x1xi32>
    %30 = arith.extui %29 : vector<8x1xi1> to vector<8x1xi32>
    %31 = arith.sitofp %30 : vector<8x1xi32> to vector<8x1xf32>
    %32 = arith.subf %26, %6 : vector<8x128xf32>
    %33 = arith.mulf %32, %32 : vector<8x128xf32>
    %cst_14 = arith.constant dense<0.000000e+00> : vector<8xf32>
    %34 = vector.multi_reduction <add>, %33, %cst_14 [1] : vector<8x128xf32> to vector<8xf32>
    %35 = vector.shape_cast %34 : vector<8xf32> to vector<8x1xf32>
    %36 = arith.mulf %35, %31 : vector<8x1xf32>
    %cst_15 = arith.constant dense<0.000000e+00> : vector<1xf32>
    %37 = vector.multi_reduction <add>, %36, %cst_15 [0] : vector<8x1xf32> to vector<1xf32>
    %38 = vector.shape_cast %37 : vector<1xf32> to vector<1x1xf32>
    %cst_16 = arith.constant 1.100000e+00 : f32
    %39 = vector.broadcast %cst_16 : f32 to vector<1x1xf32>
    %40 = arith.mulf %39, %38 : vector<1x1xf32>
    %cst_17 = arith.constant 2.560000e+02 : f32
    %41 = vector.broadcast %cst_17 : f32 to vector<1x1xf32>
    %42 = arith.divf %40, %41 : vector<1x1xf32>
    %c0_18 = arith.constant 0 : index
    %c0_19 = arith.constant 0 : index
    %43 = vector.load %arg9[%c0_18, %c0_19] : memref<1x1xf32, #tpu.memory_space<vmem>>, vector<1x1xf32>
    tpu.vector_store %arg9[%c0_18, %c0_19], %42 {strides = array<i32>} : memref<1x1xf32, #tpu.memory_space<vmem>>, vector<1x1xf32>,
    %c0_20 = arith.constant 0 : index
    %c0_21 = arith.constant 0 : index
    %44 = vector.load %arg5[%c0_20, %c0_21] : memref<128x64xf32, #tpu.memory_space<vmem>>, vector<128x64xf32>
    %cst_22 = arith.constant dense<0.000000e+00> : vector<8x64xf32>
    %45 = tpu.matmul %26, %44, %cst_22 {dimension_numbers = #tpu.dot_dimension_numbers<[1], [0], [0], [1], [0, 0, 1, 1], [], []>} : vector<8x128xf32>, vector<128x64xf32>, vector<8x64xf32> -> vector<8x64xf32>
    %c0_23 = arith.constant 0 : index
    %c0_24 = arith.constant 0 : index
    %46 = vector.load %arg6[%c0_23, %c0_24] : memref<1x64xf32, #tpu.memory_space<vmem>>, vector<1x64xf32>
    %47 = vector.broadcast %46 : vector<1x64xf32> to vector<8x64xf32>
    %48 = arith.addf %45, %47 : vector<8x64xf32>
    %cst_25 = arith.constant 0.000000e+00 : f32
    %49 = vector.broadcast %cst_25 : f32 to vector<8x64xf32>
    %50 = arith.maximumf %48, %49 : vector<8x64xf32>
    %51 = arith.truncf %50 : vector<8x64xf32> to vector<8x64xbf16>
    %c0_26 = arith.constant 0 : index
    %c0_27 = arith.constant 0 : index
    %52 = vector.load %arg7[%c0_26, %c0_27] : memref<8x64xbf16, #tpu.memory_space<vmem>>, vector<8x64xbf16>
    tpu.vector_store %arg7[%c0_26, %c0_27], %51 {strides = array<i32>} : memref<8x64xbf16, #tpu.memory_space<vmem>>, vector<8x64xbf16>,
    %c0_28 = arith.constant 0 : index
    %c0_29 = arith.constant 0 : index
    %53 = vector.load %arg8[%c0_28, %c0_29] : memref<8x1xi32, #tpu.memory_space<vmem>>, vector<8x1xi32>
    tpu.vector_store %arg8[%c0_28, %c0_29], %21 {strides = array<i32>} : memref<8x1xi32, #tpu.memory_space<vmem>>, vector<8x1xi32>,
    return
  }
}

module attributes {stable_mosaic.version = 11 : i64} {
  func.func @_decoder_tile_kernel(%arg0: i32, %arg1: memref<8x64xbf16, #tpu.memory_space<vmem>>, %arg2: memref<8x6912xf32, #tpu.memory_space<vmem>>, %arg3: memref<1x64x6912xbf16, #tpu.memory_space<vmem>>, %arg4: memref<1x6912xf32, #tpu.memory_space<vmem>>, %arg5: memref<8x6912xf32, #tpu.memory_space<vmem>>, %arg6: memref<1x8x128xf32, #tpu.memory_space<vmem>>) attributes {dimension_semantics = [#tpu.dimension_semantics<parallel>], iteration_bounds = array<i64: 4>, scalar_prefetch = 0 : i64, scratch_operands = 0 : i64, tpu.core_type = #tpu.core_type<tc>, window_params = [{pipeline_mode = #tpu.pipeline_mode<synchronous>, transform_indices = @transform_0, window_bounds = array<i64: 8, 64>}, {transform_indices = @transform_1, window_bounds = array<i64: 8, 6912>}, {transform_indices = @transform_2, window_bounds = array<i64: 1, 64, 6912>}, {transform_indices = @transform_3, window_bounds = array<i64: 1, 6912>}, {transform_indices = @transform_4, window_bounds = array<i64: 8, 6912>}, {transform_indices = @transform_5, window_bounds = array<i64: 1, 8, 128>}]} {
    %c0 = arith.constant 0 : index
    %c0_0 = arith.constant 0 : index
    %0 = vector.load %arg1[%c0, %c0_0] : memref<8x64xbf16, #tpu.memory_space<vmem>>, vector<8x64xbf16>
    %c0_1 = arith.constant 0 : index
    %c0_2 = arith.constant 0 : index
    %c0_3 = arith.constant 0 : index
    %1 = vector.load %arg3[%c0_1, %c0_2, %c0_3] : memref<1x64x6912xbf16, #tpu.memory_space<vmem>>, vector<1x64x6912xbf16>
    %2 = vector.shape_cast %1 : vector<1x64x6912xbf16> to vector<64x6912xbf16>
    %cst = arith.constant dense<0.000000e+00> : vector<8x6912xf32>
    %3 = tpu.matmul %0, %2, %cst {dimension_numbers = #tpu.dot_dimension_numbers<[1], [0], [0], [1], [0, 0, 1, 1], [], []>} : vector<8x64xbf16>, vector<64x6912xbf16>, vector<8x6912xf32> -> vector<8x6912xf32>
    %c0_4 = arith.constant 0 : index
    %c0_5 = arith.constant 0 : index
    %4 = vector.load %arg4[%c0_4, %c0_5] : memref<1x6912xf32, #tpu.memory_space<vmem>>, vector<1x6912xf32>
    %5 = vector.broadcast %4 : vector<1x6912xf32> to vector<8x6912xf32>
    %6 = arith.addf %3, %5 : vector<8x6912xf32>
    %c0_6 = arith.constant 0 : index
    %c0_7 = arith.constant 0 : index
    %7 = vector.load %arg5[%c0_6, %c0_7] : memref<8x6912xf32, #tpu.memory_space<vmem>>, vector<8x6912xf32>
    tpu.vector_store %arg5[%c0_6, %c0_7], %6 {strides = array<i32>} : memref<8x6912xf32, #tpu.memory_space<vmem>>, vector<8x6912xf32>,
    %c0_8 = arith.constant 0 : index
    %c0_9 = arith.constant 0 : index
    %8 = vector.load %arg2[%c0_8, %c0_9] : memref<8x6912xf32, #tpu.memory_space<vmem>>, vector<8x6912xf32>
    %9 = arith.subf %6, %8 : vector<8x6912xf32>
    %10 = tpu.iota {dimensions = array<i32: 0>} : vector<8x1xi32>
    %c2_i32 = arith.constant 2 : i32
    %11 = vector.broadcast %c2_i32 : i32 to vector<8x1xi32>
    %12 = arith.cmpi slt, %10, %11 : vector<8x1xi32>
    %13 = arith.extui %12 : vector<8x1xi1> to vector<8x1xi32>
    %14 = arith.sitofp %13 : vector<8x1xi32> to vector<8x1xf32>
    %15 = arith.mulf %9, %9 : vector<8x6912xf32>
    %cst_10 = arith.constant dense<0.000000e+00> : vector<8xf32>
    %16 = vector.multi_reduction <add>, %15, %cst_10 [1] : vector<8x6912xf32> to vector<8xf32>
    %17 = vector.shape_cast %16 : vector<8xf32> to vector<8x1xf32>
    %18 = arith.mulf %17, %14 : vector<8x1xf32>
    %19 = vector.shape_cast %18 : vector<8x1xf32> to vector<1x8x1xf32>
    %cst_11 = arith.constant dense<0.000000e+00> : vector<1xf32>
    %20 = vector.multi_reduction <add>, %19, %cst_11 [1, 2] : vector<1x8x1xf32> to vector<1xf32>
    %21 = vector.shape_cast %20 : vector<1xf32> to vector<1x1x1xf32>
    %22 = vector.extract %21[0, 0, 0] : f32 from vector<1x1x1xf32>
    %23 = vector.broadcast %22 : f32 to vector<1x8x128xf32>
    %c0_12 = arith.constant 0 : index
    %c0_13 = arith.constant 0 : index
    %c0_14 = arith.constant 0 : index
    %24 = vector.load %arg6[%c0_12, %c0_13, %c0_14] : memref<1x8x128xf32, #tpu.memory_space<vmem>>, vector<1x8x128xf32>
    tpu.vector_store %arg6[%c0_12, %c0_13, %c0_14], %23 {strides = array<i32>} : memref<1x8x128xf32, #tpu.memory_space<vmem>>, vector<1x8x128xf32>,
    return
  }
  func.func @transform_0(%arg0: i32) -> (i32, i32) {
    %c0_i32 = arith.constant 0 : i32
    %c0_i32_0 = arith.constant 0 : i32
    %c0_i32_1 = arith.constant 0 : i32
    return %c0_i32, %c0_i32_0 : i32, i32
  }
  func.func @transform_1(%arg0: i32) -> (i32, i32) {
    %c0_i32 = arith.constant 0 : i32
    %c0_i32_0 = arith.constant 0 : i32
    return %c0_i32, %arg0 : i32, i32
  }
  func.func @transform_2(%arg0: i32) -> (i32, i32, i32) {
    %c0_i32 = arith.constant 0 : i32
    %c0_i32_0 = arith.constant 0 : i32
    %c0_i32_1 = arith.constant 0 : i32
    return %arg0, %c0_i32, %c0_i32_0 : i32, i32, i32
  }
  func.func @transform_3(%arg0: i32) -> (i32, i32) {
    %c0_i32 = arith.constant 0 : i32
    %c0_i32_0 = arith.constant 0 : i32
    return %c0_i32, %arg0 : i32, i32
  }
  func.func @transform_4(%arg0: i32) -> (i32, i32) {
    %c0_i32 = arith.constant 0 : i32
    %c0_i32_0 = arith.constant 0 : i32
    return %c0_i32, %arg0 : i32, i32
  }
  func.func @transform_5(%arg0: i32) -> (i32, i32, i32) {
    %c0_i32 = arith.constant 0 : i32
    %c0_i32_0 = arith.constant 0 : i32
    %c0_i32_1 = arith.constant 0 : i32
    return %arg0, %c0_i32, %c0_i32_0 : i32, i32, i32
  }
}

</mosaic_0001>

<llo_original>
// kernel: encoder_vqvae_forward.2
$region0: #{encoder_vqvae_forward.2}
  #allocation0 [shape = 'u32[]', space=smem, size = 0x4, offset = 0x4, fixed_abs, tag = 'smem constant byte address 0x4 - core index']
  #allocation1 [shape = 'u32[72,128]{1,0:T(1,128)}', space=vmem, size = 0x9000, scoped, tag = 'internal scratch']
  %s0 = inlined_call_operand.vmem [shape: f32[8,64], index: 0, kind: input, shape index: {}]
  %s1 = inlined_call_operand.vmem [shape: f32[1,512], index: 1, kind: input, shape index: {}]
  %s2 = inlined_call_operand.vmem [shape: f32[64,128], index: 2, kind: input, shape index: {}]
  %s3 = inlined_call_operand.vmem [shape: f32[1,128], index: 3, kind: input, shape index: {}]
  %s4 = inlined_call_operand.vmem [shape: f32[512,128], index: 4, kind: input, shape index: {}]
  %s5 = inlined_call_operand.vmem [shape: f32[128,64], index: 5, kind: input, shape index: {}]
  %s6 = inlined_call_operand.vmem [shape: f32[1,64], index: 6, kind: input, shape index: {}]
  %s7 = inlined_call_operand.vmem [shape: bf16[8,64], index: 7, kind: output, shape index: {0}]
  %s8 = inlined_call_operand.vmem [shape: s32[8,1], index: 8, kind: output, shape index: {1}]
  %s9 = inlined_call_operand.hbm [shape: f32[1,1], index: 9, kind: output, shape index: {2}]
  %10 = xla_tuple %s7, %s8, %s9
  %s11 = sld [smem:[#allocation0]]
  $region54: #{encoder_vqvae_forward.2} parent=0
    _
  %s13 = ssub.s32 1, %s11
  %s14 = scalar_select 0, %s13, %s11
  $region1: #{encoder_vqvae_forward.2} parent=0
    #allocation2 [shape = 'u8[512]{0}', space=vmem, size = 0x400, scoped, tag = 'output window, operand 2, single buffered']
    #allocation3 [shape = 's32[1]{0}', space=sflag, size = 0x4, scoped, tag = 'scoped memory for encoder_vqvae_forward.2']
    %15 = vsyncpa [#allocation3], 0
    // Predicated region
    $region2: #{encoder_vqvae_forward.2} parent=1 // pred_check
      _
    $region3: #{encoder_vqvae_forward.2} parent=1 // pred_check_branch
      %17 = sbr.rel (0) target = $region5
    $region4: #{encoder_vqvae_forward.2} parent=1 // pred_region
      _
    $region5: #{encoder_vqvae_forward.2} parent=1 // pred_fallthru
      _
    // Predicated region
    $region6: #{encoder_vqvae_forward.2} parent=1 // pred_check
      _
    $region7: #{encoder_vqvae_forward.2} parent=1 // pred_check_branch
      %19 = sbr.rel (0) target = $region9
    $region8: #{encoder_vqvae_forward.2} parent=1 // pred_region
      _
    $region9: #{encoder_vqvae_forward.2} parent=1 // pred_fallthru
      _
    // Predicated region
    $region10: #{encoder_vqvae_forward.2} parent=1 // pred_check
      _
    $region11: #{encoder_vqvae_forward.2} parent=1 // pred_check_branch
      %21 = sbr.rel (0) target = $region13
    $region12: #{encoder_vqvae_forward.2} parent=1 // pred_region
      _
    $region13: #{encoder_vqvae_forward.2} parent=1 // pred_fallthru
      _
    // Predicated region
    $region14: #{encoder_vqvae_forward.2} parent=1 // pred_check
      _
    $region15: #{encoder_vqvae_forward.2} parent=1 // pred_check_branch
      %23 = sbr.rel (0) target = $region17
    $region16: #{encoder_vqvae_forward.2} parent=1 // pred_region
      _
    $region17: #{encoder_vqvae_forward.2} parent=1 // pred_fallthru
      _
    // Predicated region
    $region18: #{encoder_vqvae_forward.2} parent=1 // pred_check
      _
    $region19: #{encoder_vqvae_forward.2} parent=1 // pred_check_branch
      %25 = sbr.rel (0) target = $region21
    $region20: #{encoder_vqvae_forward.2} parent=1 // pred_region
      _
    $region21: #{encoder_vqvae_forward.2} parent=1 // pred_fallthru
      _
    // Predicated region
    $region22: #{encoder_vqvae_forward.2} parent=1 // pred_check
      _
    $region23: #{encoder_vqvae_forward.2} parent=1 // pred_check_branch
      %27 = sbr.rel (0) target = $region25
    $region24: #{encoder_vqvae_forward.2} parent=1 // pred_region
      _
    $region25: #{encoder_vqvae_forward.2} parent=1 // pred_fallthru
      _
    // Predicated region
    $region26: #{encoder_vqvae_forward.2} parent=1 // pred_check
      _
    $region27: #{encoder_vqvae_forward.2} parent=1 // pred_check_branch
      %29 = sbr.rel (0) target = $region29
    $region28: #{encoder_vqvae_forward.2} parent=1 // pred_region
      _
    $region29: #{encoder_vqvae_forward.2} parent=1 // pred_fallthru
      _
    %v30 = vld [vmem:[%s0] sm:$0xff]
    %v31 = vld [vmem:[%s4] sm:$0xff]
    %v32 = vld [vmem:[%s4 + $0x8] sm:$0xff]
    %v33 = vld [vmem:[%s4 + $0x10] sm:$0xff]
    %v34 = vld [vmem:[%s4 + $0x18] sm:$0xff]
    %v35 = vld [vmem:[%s4 + $0x20] sm:$0xff]
    %v36 = vld [vmem:[%s4 + $0x28] sm:$0xff]
    %v37 = vld [vmem:[%s4 + $0x30] sm:$0xff]
    %v38 = vld [vmem:[%s4 + $0x38] sm:$0xff]
    %v39 = vld [vmem:[%s4 + $0x40] sm:$0xff]
    %v40 = vld [vmem:[%s4 + $0x48] sm:$0xff]
    %v41 = vld [vmem:[%s4 + $0x50] sm:$0xff]
    %v42 = vld [vmem:[%s4 + $0x58] sm:$0xff]
    %v43 = vld [vmem:[%s4 + $0x60] sm:$0xff]
    %v44 = vld [vmem:[%s4 + $0x68] sm:$0xff]
    %v45 = vld [vmem:[%s4 + $0x70] sm:$0xff]
    %v46 = vld [vmem:[%s4 + $0x78] sm:$0xff]
    %v47 = vld [vmem:[%s4 + $0x80] sm:$0xff]
    %v48 = vld [vmem:[%s4 + $0x88] sm:$0xff]
    %v49 = vld [vmem:[%s4 + $0x90] sm:$0xff]
    %v50 = vld [vmem:[%s4 + $0x98] sm:$0xff]
    %v51 = vld [vmem:[%s4 + $0xa0] sm:$0xff]
    %v52 = vld [vmem:[%s4 + $0xa8] sm:$0xff]
    %v53 = vld [vmem:[%s4 + $0xb0] sm:$0xff]
    %v54 = vld [vmem:[%s4 + $0xb8] sm:$0xff]
    %v55 = vld [vmem:[%s4 + $0xc0] sm:$0xff]
    %v56 = vld [vmem:[%s4 + $0xc8] sm:$0xff]
    %v57 = vld [vmem:[%s4 + $0xd0] sm:$0xff]
    %v58 = vld [vmem:[%s4 + $0xd8] sm:$0xff]
    %v59 = vld [vmem:[%s4 + $0xe0] sm:$0xff]
    %v60 = vld [vmem:[%s4 + $0xe8] sm:$0xff]
    %v61 = vld [vmem:[%s4 + $0xf0] sm:$0xff]
    %v62 = vld [vmem:[%s4 + $0xf8] sm:$0xff]
    %v63 = vld [vmem:[%s4 + $0x100] sm:$0xff]
    %v64 = vld [vmem:[%s4 + $0x108] sm:$0xff]
    %v65 = vld [vmem:[%s4 + $0x110] sm:$0xff]
    %v66 = vld [vmem:[%s4 + $0x118] sm:$0xff]
    %v67 = vld [vmem:[%s4 + $0x120] sm:$0xff]
    %v68 = vld [vmem:[%s4 + $0x128] sm:$0xff]
    %v69 = vld [vmem:[%s4 + $0x130] sm:$0xff]
    %v70 = vld [vmem:[%s4 + $0x138] sm:$0xff]
    %v71 = vld [vmem:[%s4 + $0x140] sm:$0xff]
    %v72 = vld [vmem:[%s4 + $0x148] sm:$0xff]
    %v73 = vld [vmem:[%s4 + $0x150] sm:$0xff]
    %v74 = vld [vmem:[%s4 + $0x158] sm:$0xff]
    %v75 = vld [vmem:[%s4 + $0x160] sm:$0xff]
    %v76 = vld [vmem:[%s4 + $0x168] sm:$0xff]
    %v77 = vld [vmem:[%s4 + $0x170] sm:$0xff]
    %v78 = vld [vmem:[%s4 + $0x178] sm:$0xff]
    %v79 = vld [vmem:[%s4 + $0x180] sm:$0xff]
    %v80 = vld [vmem:[%s4 + $0x188] sm:$0xff]
    %v81 = vld [vmem:[%s4 + $0x190] sm:$0xff]
    %v82 = vld [vmem:[%s4 + $0x198] sm:$0xff]
    %v83 = vld [vmem:[%s4 + $0x1a0] sm:$0xff]
    %v84 = vld [vmem:[%s4 + $0x1a8] sm:$0xff]
    %v85 = vld [vmem:[%s4 + $0x1b0] sm:$0xff]
    %v86 = vld [vmem:[%s4 + $0x1b8] sm:$0xff]
    %v87 = vld [vmem:[%s4 + $0x1c0] sm:$0xff]
    %v88 = vld [vmem:[%s4 + $0x1c8] sm:$0xff]
    %v89 = vld [vmem:[%s4 + $0x1d0] sm:$0xff]
    %v90 = vld [vmem:[%s4 + $0x1d8] sm:$0xff]
    %v91 = vld [vmem:[%s4 + $0x1e0] sm:$0xff]
    %v92 = vld [vmem:[%s4 + $0x1e8] sm:$0xff]
    %v93 = vld [vmem:[%s4 + $0x1f0] sm:$0xff]
    %v94 = vld [vmem:[%s4 + $0x1f8] sm:$0xff]
    %v95 = vld [vmem:[%s2] sm:$0xff]
    %v96 = vld [vmem:[%s2 + $0x8] sm:$0xff]
    %v97 = vld [vmem:[%s2 + $0x10] sm:$0xff]
    %v98 = vld [vmem:[%s2 + $0x18] sm:$0xff]
    %v99 = vld [vmem:[%s2 + $0x20] sm:$0xff]
    %v100 = vld [vmem:[%s2 + $0x28] sm:$0xff]
    %v101 = vld [vmem:[%s2 + $0x30] sm:$0xff]
    %v102 = vld [vmem:[%s2 + $0x38] sm:$0xff]
    %v103 = vld [vmem:[%s3] sm:$0x1]
    %v105 = vperm.slane %v103, 0
    %vm107 = vcmask 523264
    %v109 = vsel %vm107, %v30, 0
    %111 = vmatpush.msra.mxu0 0.0
    %112 = vmatpush.msra.mxu0 0.0
    %113 = vmatpush.msra.mxu0 0.0
    %114 = vmatpush.msra.mxu0 0.0
    %115 = vmatpush.msra.mxu0 0.0
    %116 = vmatpush.msra.mxu0 0.0
    %117 = vmatpush.msra.mxu0 0.0
    %118 = vmatpush.msra.mxu0 0.0
    %119 = vmatpush.msra.mxu0 %v102
    %120 = vmatpush.msra.mxu0 %v101
    %121 = vmatpush.msra.mxu0 %v100
    %122 = vmatpush.msra.mxu0 %v99
    %123 = vmatpush.msra.mxu0 %v98
    %124 = vmatpush.msra.mxu0 %v97
    %125 = vmatpush.msra.mxu0 %v96
    %126 = vmatpush.msra.mxu0 %v95
    %127 = vmatmul.f32.gmra.mxu0 %v109
    %v128 = vpop.f32.mrf.mxu0
    %v129 = vadd.f32 %v105, %v128
    %130 = vdwg.mxu0
    %131 = vmatpush.xpose.msra.mxu0 %v46
    %132 = vmatpush.xpose.msra.mxu0 %v45
    %133 = vmatpush.xpose.msra.mxu0 %v44
    %134 = vmatpush.xpose.msra.mxu0 %v43
    %135 = vmatpush.xpose.msra.mxu0 %v42
    %136 = vmatpush.xpose.msra.mxu0 %v41
    %137 = vmatpush.xpose.msra.mxu0 %v40
    %138 = vmatpush.xpose.msra.mxu0 %v39
    %139 = vmatpush.xpose.msra.mxu0 %v38
    %140 = vmatpush.xpose.msra.mxu0 %v37
    %141 = vmatpush.xpose.msra.mxu0 %v36
    %142 = vmatpush.xpose.msra.mxu0 %v35
    %143 = vmatpush.xpose.msra.mxu0 %v34
    %144 = vmatpush.xpose.msra.mxu0 %v33
    %145 = vmatpush.xpose.msra.mxu0 %v32
    %146 = vmatpush.xpose.msra.mxu0 %v31
    %147 = vmatmul.f32.gmra.mxu0 %v129
    %v148 = vpop.f32.mrf.mxu0
    %v149 = vadd.f32 0.0, %v148
    %150 = vdwg.mxu0
    %151 = vmatpush.xpose.msra.mxu0 %v62
    %152 = vmatpush.xpose.msra.mxu0 %v61
    %153 = vmatpush.xpose.msra.mxu0 %v60
    %154 = vmatpush.xpose.msra.mxu0 %v59
    %155 = vmatpush.xpose.msra.mxu0 %v58
    %156 = vmatpush.xpose.msra.mxu0 %v57
    %157 = vmatpush.xpose.msra.mxu0 %v56
    %158 = vmatpush.xpose.msra.mxu0 %v55
    %159 = vmatpush.xpose.msra.mxu0 %v54
    %160 = vmatpush.xpose.msra.mxu0 %v53
    %161 = vmatpush.xpose.msra.mxu0 %v52
    %162 = vmatpush.xpose.msra.mxu0 %v51
    %163 = vmatpush.xpose.msra.mxu0 %v50
    %164 = vmatpush.xpose.msra.mxu0 %v49
    %165 = vmatpush.xpose.msra.mxu0 %v48
    %166 = vmatpush.xpose.msra.mxu0 %v47
    %167 = vmatmul.f32.gmra.mxu0 %v129
    %v168 = vpop.f32.mrf.mxu0
    %v169 = vadd.f32 0.0, %v168
    %170 = vdwg.mxu0
    %171 = vmatpush.xpose.msra.mxu0 %v78
    %172 = vmatpush.xpose.msra.mxu0 %v77
    %173 = vmatpush.xpose.msra.mxu0 %v76
    %174 = vmatpush.xpose.msra.mxu0 %v75
    %175 = vmatpush.xpose.msra.mxu0 %v74
    %176 = vmatpush.xpose.msra.mxu0 %v73
    %177 = vmatpush.xpose.msra.mxu0 %v72
    %178 = vmatpush.xpose.msra.mxu0 %v71
    %179 = vmatpush.xpose.msra.mxu0 %v70
    %180 = vmatpush.xpose.msra.mxu0 %v69
    %181 = vmatpush.xpose.msra.mxu0 %v68
    %182 = vmatpush.xpose.msra.mxu0 %v67
    %183 = vmatpush.xpose.msra.mxu0 %v66
    %184 = vmatpush.xpose.msra.mxu0 %v65
    %185 = vmatpush.xpose.msra.mxu0 %v64
    %186 = vmatpush.xpose.msra.mxu0 %v63
    %187 = vmatmul.f32.gmra.mxu0 %v129
    %v188 = vpop.f32.mrf.mxu0
    %v189 = vadd.f32 0.0, %v188
    %190 = vdwg.mxu0
    %191 = vmatpush.xpose.msra.mxu0 %v94
    %192 = vmatpush.xpose.msra.mxu0 %v93
    %193 = vmatpush.xpose.msra.mxu0 %v92
    %194 = vmatpush.xpose.msra.mxu0 %v91
    %195 = vmatpush.xpose.msra.mxu0 %v90
    %196 = vmatpush.xpose.msra.mxu0 %v89
    %197 = vmatpush.xpose.msra.mxu0 %v88
    %198 = vmatpush.xpose.msra.mxu0 %v87
    %199 = vmatpush.xpose.msra.mxu0 %v86
    %200 = vmatpush.xpose.msra.mxu0 %v85
    %201 = vmatpush.xpose.msra.mxu0 %v84
    %202 = vmatpush.xpose.msra.mxu0 %v83
    %203 = vmatpush.xpose.msra.mxu0 %v82
    %204 = vmatpush.xpose.msra.mxu0 %v81
    %205 = vmatpush.xpose.msra.mxu0 %v80
    %206 = vmatpush.xpose.msra.mxu0 %v79
    %207 = vmatmul.f32.gmra.mxu0 %v129
    %v208 = vpop.f32.mrf.mxu0
    %v209 = vadd.f32 0.0, %v208
    %210 = vdwg.mxu0
    %v211 = vld [vmem:[%s1] sm:$0xf]
    %v212 = vmul.f32 %v149, 2.0
    %v213 = vmul.f32 %v169, 2.0
    %v214 = vmul.f32 %v189, 2.0
    %v215 = vmul.f32 %v209, 2.0
    %v217 = vperm.slane %v211, 0
    %v218 = vperm.slane %v211, 1
    %v219 = vperm.slane %v211, 2
    %v220 = vperm.slane %v211, 3
    %v225 = vsub.f32 %v217, %v212
    %v226 = vsub.f32 %v218, %v213
    %v227 = vsub.f32 %v219, %v214
    %v228 = vsub.f32 %v220, %v215
    %v229 = vmin.f32 %v225, %v226
    %v230 = vmin.f32 %v227, %v228
    %v231 = vmin.f32 %v229, %v230
    %232 = vmin.xlane.f32.xlu0 %v231
    %v233 = vpop.xlane.xlu0 %232
    %v234 = vlaneseq
    %v235 = vand.u32 %v234, 127
    %v236 = vadd.s32 %v235, 128
    %v237 = vadd.s32 %v235, 256
    %v238 = vadd.s32 %v235, 384
    %vm239 = vcmp.le.f32.partialorder %v225, %v233
    %vm240 = vcmp.le.f32.partialorder %v226, %v233
    %vm241 = vcmp.le.f32.partialorder %v227, %v233
    %vm242 = vcmp.le.f32.partialorder %v228, %v233
    %v243 = vsel %vm239, %v235, 512
    %v244 = vsel %vm240, %v236, 512
    %v245 = vsel %vm241, %v237, 512
    %v246 = vsel %vm242, %v238, 512
    %vm247 = vcmp.lt.s32.totalorder %v243, %v244
    %v248 = vsel %vm247, %v243, %v244
    %vm249 = vcmp.lt.s32.totalorder %v245, %v246
    %v250 = vsel %vm249, %v245, %v246
    %vm251 = vcmp.lt.s32.totalorder %v248, %v250
    %v252 = vsel %vm251, %v248, %v250
    %v253 = vand.u32 %v252, 65535
    %v254 = vshra.s32 %v252, 16
    %v255 = vcvt.s32.f32 %v253
    %v256 = vcvt.s32.f32 %v254
    %257 = vmin.xlane.f32.xlu0 %v256
    %v258 = vpop.xlane.xlu0 %257
    %vm259 = vcmp.eq.f32.partialorder %v256, %v258
    %v260 = vsel %vm259, %v255, inf
    %261 = vmin.xlane.f32.xlu0 %v260
    %v262 = vpop.xlane.xlu0 %261
    %v263 = vcvt.f32.s32 %v262
    %v264 = vcvt.f32.s32 %v258
    %v265 = vshll.u32 %v264, 16
    %v266 = vadd.s32 %v265, %v263
    %vm267 = vcmp.eq.s32.totalorder %v235, %v266
    %vm268 = vcmp.eq.s32.totalorder %v236, %v266
    %vm269 = vcmp.eq.s32.totalorder %v237, %v266
    %vm270 = vcmp.eq.s32.totalorder %v238, %v266
    %v271 = vsel %vm267, 1, 0
    %v272 = vsel %vm268, 1, 0
    %v273 = vsel %vm269, 1, 0
    %v274 = vsel %vm270, 1, 0
    %v275 = vcvt.s32.f32 %v271
    %v276 = vcvt.s32.f32 %v272
    %v277 = vcvt.s32.f32 %v273
    %v278 = vcvt.s32.f32 %v274
    %279 = vmatpush.msra.mxu0 %v46
    %280 = vmatpush.msra.mxu0 %v45
    %281 = vmatpush.msra.mxu0 %v44
    %282 = vmatpush.msra.mxu0 %v43
    %283 = vmatpush.msra.mxu0 %v42
    %284 = vmatpush.msra.mxu0 %v41
    %285 = vmatpush.msra.mxu0 %v40
    %286 = vmatpush.msra.mxu0 %v39
    %287 = vmatpush.msra.mxu0 %v38
    %288 = vmatpush.msra.mxu0 %v37
    %289 = vmatpush.msra.mxu0 %v36
    %290 = vmatpush.msra.mxu0 %v35
    %291 = vmatpush.msra.mxu0 %v34
    %292 = vmatpush.msra.mxu0 %v33
    %293 = vmatpush.msra.mxu0 %v32
    %294 = vmatpush.msra.mxu0 %v31
    %295 = vmatmul.f32.gmra.mxu0 %v275
    %v296 = vpop.f32.mrf.mxu0
    %v297 = vadd.f32 0.0, %v296
    %298 = vdwg.mxu0
    %299 = vmatpush.msra.mxu0 %v62
    %300 = vmatpush.msra.mxu0 %v61
    %301 = vmatpush.msra.mxu0 %v60
    %302 = vmatpush.msra.mxu0 %v59
    %303 = vmatpush.msra.mxu0 %v58
    %304 = vmatpush.msra.mxu0 %v57
    %305 = vmatpush.msra.mxu0 %v56
    %306 = vmatpush.msra.mxu0 %v55
    %307 = vmatpush.msra.mxu0 %v54
    %308 = vmatpush.msra.mxu0 %v53
    %309 = vmatpush.msra.mxu0 %v52
    %310 = vmatpush.msra.mxu0 %v51
    %311 = vmatpush.msra.mxu0 %v50
    %312 = vmatpush.msra.mxu0 %v49
    %313 = vmatpush.msra.mxu0 %v48
    %314 = vmatpush.msra.mxu0 %v47
    %315 = vmatmul.f32.gmra.mxu0 %v276
    %v316 = vpop.f32.mrf.mxu0
    %v317 = vadd.f32 %v297, %v316
    %318 = vdwg.mxu0
    %319 = vmatpush.msra.mxu0 %v78
    %320 = vmatpush.msra.mxu0 %v77
    %321 = vmatpush.msra.mxu0 %v76
    %322 = vmatpush.msra.mxu0 %v75
    %323 = vmatpush.msra.mxu0 %v74
    %324 = vmatpush.msra.mxu0 %v73
    %325 = vmatpush.msra.mxu0 %v72
    %326 = vmatpush.msra.mxu0 %v71
    %327 = vmatpush.msra.mxu0 %v70
    %328 = vmatpush.msra.mxu0 %v69
    %329 = vmatpush.msra.mxu0 %v68
    %330 = vmatpush.msra.mxu0 %v67
    %331 = vmatpush.msra.mxu0 %v66
    %332 = vmatpush.msra.mxu0 %v65
    %333 = vmatpush.msra.mxu0 %v64
    %334 = vmatpush.msra.mxu0 %v63
    %335 = vmatmul.f32.gmra.mxu0 %v277
    %v336 = vpop.f32.mrf.mxu0
    %v337 = vadd.f32 %v317, %v336
    %338 = vdwg.mxu0
    %339 = vmatpush.msra.mxu0 %v94
    %340 = vmatpush.msra.mxu0 %v93
    %341 = vmatpush.msra.mxu0 %v92
    %342 = vmatpush.msra.mxu0 %v91
    %343 = vmatpush.msra.mxu0 %v90
    %344 = vmatpush.msra.mxu0 %v89
    %345 = vmatpush.msra.mxu0 %v88
    %346 = vmatpush.msra.mxu0 %v87
    %347 = vmatpush.msra.mxu0 %v86
    %348 = vmatpush.msra.mxu0 %v85
    %349 = vmatpush.msra.mxu0 %v84
    %350 = vmatpush.msra.mxu0 %v83
    %351 = vmatpush.msra.mxu0 %v82
    %352 = vmatpush.msra.mxu0 %v81
    %353 = vmatpush.msra.mxu0 %v80
    %354 = vmatpush.msra.mxu0 %v79
    %355 = vmatmul.f32.gmra.mxu0 %v278
    %v356 = vpop.f32.mrf.mxu0
    %v357 = vadd.f32 %v337, %v356
    %358 = vdwg.mxu0
    %v359 = vlaneseq
    %v360 = vshrl.u32 %v359, 7
    %vm361 = vcmp.lt.s32.totalorder %v360, 2
    %v362 = vsel %vm361, 1, 0
    %v363 = vcvt.s32.f32 %v362
    %v364 = vsub.f32 %v357, %v129
    %v365 = vmul.f32 %v364, %v364
    %366 = vadd.xlane.f32.xlu0 %v365
    %v367 = vpop.xlane.xlu0 %366
    %v368 = vmul.f32 %v367, %v363
    %v369 = vrot.slane %v368, 4
    %v370 = vadd.f32 %v368, %v369
    %v371 = vrot.slane %v370, 2
    %v372 = vadd.f32 %v370, %v371
    %v373 = vrot.slane %v372, 1
    %v374 = vadd.f32 %v372, %v373
    %v375 = vmul.f32 %v374, 1.1
    %v376 = vrcp.pop 256.0
    %v377 = vmul.f32 256.0, %v376
    %v378 = vsub.f32 1.0, %v377
    %v379 = vmul.f32 %v376, %v378
    %v380 = vadd.f32 %v376, %v379
    %vm381 = vweird.f32 %v376
    %v382 = vsel %vm381, %v376, %v380
    %v383 = vmul.f32 %v375, %v382
    %vm384 = vcmask 0
    %385 = vst.msk [vmem:[#allocation2] sm:$0x1] %vm384, %v383
    %v386 = vld [vmem:[%s5] sm:$0xff]
    %v387 = vld [vmem:[%s5 + $0x8] sm:$0xff]
    %v388 = vld [vmem:[%s5 + $0x10] sm:$0xff]
    %v389 = vld [vmem:[%s5 + $0x18] sm:$0xff]
    %v390 = vld [vmem:[%s5 + $0x20] sm:$0xff]
    %v391 = vld [vmem:[%s5 + $0x28] sm:$0xff]
    %v392 = vld [vmem:[%s5 + $0x30] sm:$0xff]
    %v393 = vld [vmem:[%s5 + $0x38] sm:$0xff]
    %v394 = vld [vmem:[%s5 + $0x40] sm:$0xff]
    %v395 = vld [vmem:[%s5 + $0x48] sm:$0xff]
    %v396 = vld [vmem:[%s5 + $0x50] sm:$0xff]
    %v397 = vld [vmem:[%s5 + $0x58] sm:$0xff]
    %v398 = vld [vmem:[%s5 + $0x60] sm:$0xff]
    %v399 = vld [vmem:[%s5 + $0x68] sm:$0xff]
    %v400 = vld [vmem:[%s5 + $0x70] sm:$0xff]
    %v401 = vld [vmem:[%s5 + $0x78] sm:$0xff]
    %v402 = vld [vmem:[%s6] sm:$0x1]
    %v404 = vperm.slane %v402, 0
    %406 = vmatpush.msra.mxu0 %v401
    %407 = vmatpush.msra.mxu0 %v400
    %408 = vmatpush.msra.mxu0 %v399
    %409 = vmatpush.msra.mxu0 %v398
    %410 = vmatpush.msra.mxu0 %v397
    %411 = vmatpush.msra.mxu0 %v396
    %412 = vmatpush.msra.mxu0 %v395
    %413 = vmatpush.msra.mxu0 %v394
    %414 = vmatpush.msra.mxu0 %v393
    %415 = vmatpush.msra.mxu0 %v392
    %416 = vmatpush.msra.mxu0 %v391
    %417 = vmatpush.msra.mxu0 %v390
    %418 = vmatpush.msra.mxu0 %v389
    %419 = vmatpush.msra.mxu0 %v388
    %420 = vmatpush.msra.mxu0 %v387
    %421 = vmatpush.msra.mxu0 %v386
    %422 = vmatmul.f32.gmra.mxu0 %v357
    %v423 = vpop.f32.mrf.mxu0
    %v424 = vadd.f32 %v404, %v423
    %425 = vdwg.mxu0
    %v426 = vmax.f32 %v424, 0.0
    %v427 = vpack.c.bf16 %v426, %v426
    %vm428 = vcmask 519168
    %429 = vst.msk [vmem:[%s7] sm:$0xf] %vm428, %v427
    %vm430 = vcmask 7168
    %431 = vst.msk [vmem:[%s8] sm:$0xff] %vm430, %v266
    // Predicated region
    $region30: #{encoder_vqvae_forward.2} parent=1 // pred_check
      _
    $region31: #{encoder_vqvae_forward.2} parent=1 // pred_check_branch
      %433 = sbr.rel (0) target = $region33
    $region32: #{encoder_vqvae_forward.2} parent=1 // pred_region
      _
    $region33: #{encoder_vqvae_forward.2} parent=1 // pred_fallthru
      _
    // Predicated region
    $region34: #{encoder_vqvae_forward.2} parent=1 // pred_check
      _
    $region35: #{encoder_vqvae_forward.2} parent=1 // pred_check_branch
      %435 = sbr.rel (0) target = $region37
    $region36: #{encoder_vqvae_forward.2} parent=1 // pred_region
      _
    $region37: #{encoder_vqvae_forward.2} parent=1 // pred_fallthru
      _
    // Predicated region
    $region38: #{encoder_vqvae_forward.2} parent=1 // pred_check
      _
    $region39: #{encoder_vqvae_forward.2} parent=1 // pred_check_branch
      %437 = sbr.rel (0) target = $region41
    $region40: #{encoder_vqvae_forward.2} parent=1 // pred_region
      %439 = vsyncadd [#allocation3], 0
      %s441 = sshll.u32 [#allocation2], 4
      %s442 = int_to_ptr.vmem [resolvable:$true] %s441
      %s443 = sshll.u32 %s9, 4
      %s444 = int_to_ptr.hbm [resolvable:$true] %s443
      %446 = dma.vmem_to_hbm [thread:$0]  %s442, 16, %s444, [#allocation3]
    $region41: #{encoder_vqvae_forward.2} parent=1 // pred_fallthru
      _
    // Predicated region
    $region42: #{encoder_vqvae_forward.2} parent=1 // pred_check
      _
    $region43: #{encoder_vqvae_forward.2} parent=1 // pred_check_branch
      %448 = sbr.rel (0) target = $region45
    $region44: #{encoder_vqvae_forward.2} parent=1 // pred_region
      _
    $region45: #{encoder_vqvae_forward.2} parent=1 // pred_fallthru
      _
    // Predicated region
    $region46: #{encoder_vqvae_forward.2} parent=1 // pred_check
      _
    $region47: #{encoder_vqvae_forward.2} parent=1 // pred_check_branch
      %450 = sbr.rel (0) target = $region49
    $region48: #{encoder_vqvae_forward.2} parent=1 // pred_region
      _
    $region49: #{encoder_vqvae_forward.2} parent=1 // pred_fallthru
      _
    // Predicated region
    $region50: #{encoder_vqvae_forward.2} parent=1 // pred_check
      _
    $region51: #{encoder_vqvae_forward.2} parent=1 // pred_check_branch
      %452 = sbr.rel (0) target = $region53
    $region52: #{encoder_vqvae_forward.2} parent=1 // pred_region
      %454 = dma.done [#allocation3], 16
    $region53: #{encoder_vqvae_forward.2} parent=1 // pred_fallthru
      _
    %455 = vsyncpa [#allocation3], 1

// kernel: encoder_vqvae_forward.3
$region0: #{encoder_vqvae_forward.3}
  #allocation0 [shape = 'u32[]', space=smem, size = 0x4, offset = 0x4, fixed_abs, tag = 'smem constant byte address 0x4 - core index']
  #allocation1 [shape = 'u32[72,128]{1,0:T(1,128)}', space=vmem, size = 0x9000, scoped, tag = 'internal scratch']
  %s0 = inlined_call_operand.vmem [shape: bf16[8,64], index: 0, kind: input, shape index: {}]
  %s1 = inlined_call_operand.vmem [shape: f32[8,27648], index: 1, kind: input, shape index: {}]
  %s2 = inlined_call_operand.vmem [shape: bf16[4,64,6912], index: 2, kind: input, shape index: {}]
  %s3 = inlined_call_operand.vmem [shape: f32[1,27648], index: 3, kind: input, shape index: {}]
  %s4 = inlined_call_operand.vmem [shape: f32[8,27648], index: 4, kind: output, shape index: {0}]
  %s5 = inlined_call_operand.vmem [shape: f32[4,8,128], index: 5, kind: output, shape index: {1}]
  %6 = xla_tuple %s4, %s5
  %s7 = sld [smem:[#allocation0]]
  $region57: #{encoder_vqvae_forward.3} parent=0
    _
  %s9 = ssub.s32 1, %s7
  %s10 = scalar_select 0, %s9, %s7
  loop: start=0, step=1, limit=6
  $region2: #{encoder_vqvae_forward.3} parent=0 // loop_pre_header
    _
  $region3: #{encoder_vqvae_forward.3} parent=0 // loop_header
    %s12 = sphi 0, %s16
    %p13 = scmp.ge.s32.totalorder %s12, 6
    %s20 = sphi 0, %s20
    %s22 = sphi 0, %s20
    %s23 = sphi 0, %s22
    %s37 = sphi 0, %s23
    %s43 = sphi 0, %s45
    %s46 = sphi 0, %s43
    %s47 = sphi 0, %s46
    %s63 = sphi 0, %s47
    %s69 = sphi 0, %s71
    %s72 = sphi 0, %s69
    %s73 = sphi 0, %s72
    %s89 = sphi 0, %s73
    %s95 = sphi 0, %s97
    %s98 = sphi 0, %s95
    %s99 = sphi 0, %s98
    %s115 = sphi 0, %s99
    %s121 = sphi 0, %s123
    %s124 = sphi 0, %s121
    %s125 = sphi 0, %s124
    %s141 = sphi 0, %s125
    %s147 = sphi 0, %s149
    %s150 = sphi 0, %s147
    %s151 = sphi 0, %s150
    %s167 = sphi 0, %s151
  $region4: #{encoder_vqvae_forward.3} parent=0 // loop_header_branch
    %15 = sbr.rel (%p13) target = $region8
  $region5: #{encoder_vqvae_forward.3} parent=0 // loop_body
    %s17 = ssub.s32 %s12, 1
    %s18 = ssub.s32 %s12, 2
    %s19 = sadd.s32 %s12, 1
    %s21 = sadd.s32 %s20, 1
    %p24 = scmp.eq.s32.totalorder %s12, 3
    %p25 = scmp.ne.s32.totalorder %s20, %s22
    %p26 = scmp.eq.s32.totalorder %s12, 0
    %p27 = por %p25, %p26
    %p28 = scmp.ne.s32.totalorder %s20, %s22
    %p29 = scmp.eq.s32.totalorder %s17, 3
    %p30 = por %p28, %p29
    %p31 = scmp.ne.s32.totalorder %s22, %s23
    %p32 = scmp.eq.s32.totalorder %s17, 0
    %p33 = por %p31, %p32
    %p34 = scmp.ne.s32.totalorder %s22, %s23
    %p35 = scmp.eq.s32.totalorder %s18, 3
    %p36 = por %p34, %p35
    %p38 = scmp.ne.s32.totalorder %s23, %s37
    %p39 = scmp.eq.s32.totalorder %s18, 0
    %p40 = por %p38, %p39
    %s41 = ssub.s32 %s12, %s19
    %p42 = scmp.eq.s32.totalorder %s41, 0
    %s44 = sadd.s32 %s43, 1
    %s45 = scalar_select %p42, %s43, %s44
    %p48 = pneg %p42
    %p49 = scmp.eq.s32.totalorder %s12, 3
    %p50 = por %p48, %p49
    %p51 = scmp.ne.s32.totalorder %s43, %s46
    %p52 = scmp.eq.s32.totalorder %s12, 0
    %p53 = por %p51, %p52
    %p54 = scmp.ne.s32.totalorder %s43, %s46
    %p55 = scmp.eq.s32.totalorder %s17, 3
    %p56 = por %p54, %p55
    %p57 = scmp.ne.s32.totalorder %s46, %s47
    %p58 = scmp.eq.s32.totalorder %s17, 0
    %p59 = por %p57, %p58
    %p60 = scmp.ne.s32.totalorder %s46, %s47
    %p61 = scmp.eq.s32.totalorder %s18, 3
    %p62 = por %p60, %p61
    %p64 = scmp.ne.s32.totalorder %s47, %s63
    %p65 = scmp.eq.s32.totalorder %s18, 0
    %p66 = por %p64, %p65
    %s67 = ssub.s32 %s12, %s19
    %p68 = scmp.eq.s32.totalorder %s67, 0
    %s70 = sadd.s32 %s69, 1
    %s71 = scalar_select %p68, %s69, %s70
    %p74 = pneg %p68
    %p75 = scmp.eq.s32.totalorder %s12, 3
    %p76 = por %p74, %p75
    %p77 = scmp.ne.s32.totalorder %s69, %s72
    %p78 = scmp.eq.s32.totalorder %s12, 0
    %p79 = por %p77, %p78
    %p80 = scmp.ne.s32.totalorder %s69, %s72
    %p81 = scmp.eq.s32.totalorder %s17, 3
    %p82 = por %p80, %p81
    %p83 = scmp.ne.s32.totalorder %s72, %s73
    %p84 = scmp.eq.s32.totalorder %s17, 0
    %p85 = por %p83, %p84
    %p86 = scmp.ne.s32.totalorder %s72, %s73
    %p87 = scmp.eq.s32.totalorder %s18, 3
    %p88 = por %p86, %p87
    %p90 = scmp.ne.s32.totalorder %s73, %s89
    %p91 = scmp.eq.s32.totalorder %s18, 0
    %p92 = por %p90, %p91
    %s93 = ssub.s32 %s12, %s19
    %p94 = scmp.eq.s32.totalorder %s93, 0
    %s96 = sadd.s32 %s95, 1
    %s97 = scalar_select %p94, %s95, %s96
    %p100 = pneg %p94
    %p101 = scmp.eq.s32.totalorder %s12, 3
    %p102 = por %p100, %p101
    %p103 = scmp.ne.s32.totalorder %s95, %s98
    %p104 = scmp.eq.s32.totalorder %s12, 0
    %p105 = por %p103, %p104
    %p106 = scmp.ne.s32.totalorder %s95, %s98
    %p107 = scmp.eq.s32.totalorder %s17, 3
    %p108 = por %p106, %p107
    %p109 = scmp.ne.s32.totalorder %s98, %s99
    %p110 = scmp.eq.s32.totalorder %s17, 0
    %p111 = por %p109, %p110
    %p112 = scmp.ne.s32.totalorder %s98, %s99
    %p113 = scmp.eq.s32.totalorder %s18, 3
    %p114 = por %p112, %p113
    %p116 = scmp.ne.s32.totalorder %s99, %s115
    %p117 = scmp.eq.s32.totalorder %s18, 0
    %p118 = por %p116, %p117
    %s119 = ssub.s32 %s12, %s19
    %p120 = scmp.eq.s32.totalorder %s119, 0
    %s122 = sadd.s32 %s121, 1
    %s123 = scalar_select %p120, %s121, %s122
    %p126 = pneg %p120
    %p127 = scmp.eq.s32.totalorder %s12, 3
    %p128 = por %p126, %p127
    %p129 = scmp.ne.s32.totalorder %s121, %s124
    %p130 = scmp.eq.s32.totalorder %s12, 0
    %p131 = por %p129, %p130
    %p132 = scmp.ne.s32.totalorder %s121, %s124
    %p133 = scmp.eq.s32.totalorder %s17, 3
    %p134 = por %p132, %p133
    %p135 = scmp.ne.s32.totalorder %s124, %s125
    %p136 = scmp.eq.s32.totalorder %s17, 0
    %p137 = por %p135, %p136
    %p138 = scmp.ne.s32.totalorder %s124, %s125
    %p139 = scmp.eq.s32.totalorder %s18, 3
    %p140 = por %p138, %p139
    %p142 = scmp.ne.s32.totalorder %s125, %s141
    %p143 = scmp.eq.s32.totalorder %s18, 0
    %p144 = por %p142, %p143
    %s145 = ssub.s32 %s12, %s19
    %p146 = scmp.eq.s32.totalorder %s145, 0
    %s148 = sadd.s32 %s147, 1
    %s149 = scalar_select %p146, %s147, %s148
    %p152 = pneg %p146
    %p153 = scmp.eq.s32.totalorder %s12, 3
    %p154 = por %p152, %p153
    %p155 = scmp.ne.s32.totalorder %s147, %s150
    %p156 = scmp.eq.s32.totalorder %s12, 0
    %p157 = por %p155, %p156
    %p158 = scmp.ne.s32.totalorder %s147, %s150
    %p159 = scmp.eq.s32.totalorder %s17, 3
    %p160 = por %p158, %p159
    %p161 = scmp.ne.s32.totalorder %s150, %s151
    %p162 = scmp.eq.s32.totalorder %s17, 0
    %p163 = por %p161, %p162
    %p164 = scmp.ne.s32.totalorder %s150, %s151
    %p165 = scmp.eq.s32.totalorder %s18, 3
    %p166 = por %p164, %p165
    %p168 = scmp.ne.s32.totalorder %s151, %s167
    %p169 = scmp.eq.s32.totalorder %s18, 0
    %p170 = por %p168, %p169
    %p171 = scmp.le.s32.totalorder 1, %s12
    %p172 = scmp.lt.s32.totalorder %s12, 5
    %p173 = pnand %p171, %p172
    %p174 = pneg %p173
    // Predicated region
    $region9: #{encoder_vqvae_forward.3} parent=5 // pred_check
      _
    $region10: #{encoder_vqvae_forward.3} parent=5 // pred_check_branch
      %176 = sbr.rel (%p173) target = $region12
    $region11: #{encoder_vqvae_forward.3} parent=5 // pred_region
      %s177 = ssub.s32 %s12, 1
      // Predicated region
      $region13: #{encoder_vqvae_forward.3} parent=11 // pred_check
        %p178 = pneg %p33
      $region14: #{encoder_vqvae_forward.3} parent=11 // pred_check_branch
        %180 = sbr.rel (%p178) target = $region16
      $region15: #{encoder_vqvae_forward.3} parent=11 // pred_region
        _
      $region16: #{encoder_vqvae_forward.3} parent=11 // pred_fallthru
        _
    $region12: #{encoder_vqvae_forward.3} parent=5 // pred_fallthru
      _
    %p181 = scmp.lt.s32.totalorder %s12, 4
    // Predicated region
    $region17: #{encoder_vqvae_forward.3} parent=5 // pred_check
      %p182 = pneg %p181
    $region18: #{encoder_vqvae_forward.3} parent=5 // pred_check_branch
      %184 = sbr.rel (%p182) target = $region20
    $region19: #{encoder_vqvae_forward.3} parent=5 // pred_region
      // Predicated region
      $region21: #{encoder_vqvae_forward.3} parent=19 // pred_check
        %p185 = pneg %p53
      $region22: #{encoder_vqvae_forward.3} parent=19 // pred_check_branch
        %187 = sbr.rel (%p185) target = $region24
      $region23: #{encoder_vqvae_forward.3} parent=19 // pred_region
        %s188 = smul.u32 54, %s12
        %p189 = scmp.lt.s32.totalorder %s188, 215
        %s190 = scalar_select %p189, %s188, 215
        %s191 = smul.addr %s190, 8
        %s192 = scalar_lea.vmem %s1, %s191
        %s193 = smul.u32 54, %s12
      $region24: #{encoder_vqvae_forward.3} parent=19 // pred_fallthru
        _
      // Predicated region
      $region25: #{encoder_vqvae_forward.3} parent=19 // pred_check
        %p194 = pneg %p79
      $region26: #{encoder_vqvae_forward.3} parent=19 // pred_check_branch
        %196 = sbr.rel (%p194) target = $region28
      $region27: #{encoder_vqvae_forward.3} parent=19 // pred_region
        %p197 = scmp.lt.s32.totalorder %s12, 3
        %s198 = scalar_select %p197, %s12, 3
        %s199 = smul.addr %s198, 432
        %s200 = smul.addr %s199, 4
        %s201 = scalar_lea.vmem %s2, %s200
      $region28: #{encoder_vqvae_forward.3} parent=19 // pred_fallthru
        _
      // Predicated region
      $region29: #{encoder_vqvae_forward.3} parent=19 // pred_check
        %p202 = pneg %p105
      $region30: #{encoder_vqvae_forward.3} parent=19 // pred_check_branch
        %204 = sbr.rel (%p202) target = $region32
      $region31: #{encoder_vqvae_forward.3} parent=19 // pred_region
        %s205 = smul.u32 54, %s12
        %p206 = scmp.lt.s32.totalorder %s205, 215
        %s207 = scalar_select %p206, %s205, 215
        %s208 = scalar_lea.vmem %s3, %s207
        %s209 = smul.u32 54, %s12
      $region32: #{encoder_vqvae_forward.3} parent=19 // pred_fallthru
        _
    $region20: #{encoder_vqvae_forward.3} parent=5 // pred_fallthru
      _
    %p210 = scmp.le.s32.totalorder 1, %s12
    %p211 = scmp.lt.s32.totalorder %s12, 5
    %p212 = pnand %p210, %p211
    %p213 = pneg %p212
    // Predicated region
    $region33: #{encoder_vqvae_forward.3} parent=5 // pred_check
      _
    $region34: #{encoder_vqvae_forward.3} parent=5 // pred_check_branch
      %215 = sbr.rel (%p212) target = $region36
    $region35: #{encoder_vqvae_forward.3} parent=5 // pred_region
      %s216 = ssub.s32 %s12, 1
      %p217 = pneg %p33
      %p218 = pneg %p30
      %s219 = smul.u32 54, %s17
      %p220 = scmp.lt.s32.totalorder %s219, 215
      %s221 = scalar_select %p220, %s219, 215
      %s222 = smul.addr %s221, 8
      %s223 = scalar_lea.vmem %s1, %s222
      %p224 = pneg %p59
      %p225 = pneg %p56
      %p226 = scmp.lt.s32.totalorder %s17, 3
      %s227 = scalar_select %p226, %s17, 3
      %s228 = smul.addr %s227, 432
      %s229 = smul.addr %s228, 4
      %s230 = scalar_lea.vmem %s2, %s229
      %p231 = pneg %p85
      %p232 = pneg %p82
      %s233 = smul.u32 54, %s17
      %p234 = scmp.lt.s32.totalorder %s233, 215
      %s235 = scalar_select %p234, %s233, 215
      %s236 = scalar_lea.vmem %s3, %s235
      %p237 = pneg %p111
      %p238 = pneg %p108
      %p239 = pneg %p137
      %p240 = pneg %p134
      %s241 = smul.u32 54, %s17
      %p242 = scmp.lt.s32.totalorder %s241, 215
      %s243 = scalar_select %p242, %s241, 215
      %s244 = smul.addr %s243, 8
      %s245 = scalar_lea.vmem %s4, %s244
      %p246 = pneg %p163
      %p247 = pneg %p160
      %p248 = scmp.lt.s32.totalorder %s17, 3
      %s249 = scalar_select %p248, %s17, 3
      %s250 = smul.addr %s249, 8
      %s251 = scalar_lea.vmem %s5, %s250
      %s252 = smul.u32 54, %s17
      %p253 = scmp.lt.s32.totalorder %s252, 215
      %s254 = scalar_select %p253, %s252, 215
      %s255 = smul.addr %s254, 8
      %s256 = scalar_lea.vmem %s1, %s255
      %s257 = smul.u32 54, %s17
      %p258 = scmp.lt.s32.totalorder %s17, 3
      %s259 = scalar_select %p258, %s17, 3
      %s260 = smul.addr %s259, 432
      %s261 = smul.addr %s260, 4
      %s262 = scalar_lea.vmem %s2, %s261
      %s263 = smul.u32 54, %s17
      %p264 = scmp.lt.s32.totalorder %s263, 215
      %s265 = scalar_select %p264, %s263, 215
      %s266 = scalar_lea.vmem %s3, %s265
      %s267 = smul.u32 54, %s17
      %s268 = smul.u32 54, %s17
      %p269 = scmp.lt.s32.totalorder %s268, 215
      %s270 = scalar_select %p269, %s268, 215
      %s271 = smul.addr %s270, 8
      %s272 = scalar_lea.vmem %s4, %s271
      %s273 = smul.u32 54, %s17
      %p274 = scmp.lt.s32.totalorder %s17, 3
      %s275 = scalar_select %p274, %s17, 3
      %s276 = smul.addr %s275, 8
      %s277 = scalar_lea.vmem %s5, %s276
      %v279 = vld [vmem:[%s0] sm:$0xf]
      %v280 = vld [vmem:[%s262] sm:$0xff]
      %v281 = vld [vmem:[%s262 + $0x8] sm:$0xff]
      %v282 = vld [vmem:[%s262 + $0x10] sm:$0xff]
      %v283 = vld [vmem:[%s262 + $0x18] sm:$0xff]
      %v284 = vld [vmem:[%s262 + $0x20] sm:$0xff]
      %v285 = vld [vmem:[%s262 + $0x28] sm:$0xff]
      %v286 = vld [vmem:[%s262 + $0x30] sm:$0xff]
      %v287 = vld [vmem:[%s262 + $0x38] sm:$0xff]
      %v288 = vld [vmem:[%s262 + $0x40] sm:$0xff]
      %v289 = vld [vmem:[%s262 + $0x48] sm:$0xff]
      %v290 = vld [vmem:[%s262 + $0x50] sm:$0xff]
      %v291 = vld [vmem:[%s262 + $0x58] sm:$0xff]
      %v292 = vld [vmem:[%s262 + $0x60] sm:$0xff]
      %v293 = vld [vmem:[%s262 + $0x68] sm:$0xff]
      %v294 = vld [vmem:[%s262 + $0x70] sm:$0xff]
      %v295 = vld [vmem:[%s262 + $0x78] sm:$0xff]
      %v296 = vld [vmem:[%s262 + $0x80] sm:$0xff]
      %v297 = vld [vmem:[%s262 + $0x88] sm:$0xff]
      %v298 = vld [vmem:[%s262 + $0x90] sm:$0xff]
      %v299 = vld [vmem:[%s262 + $0x98] sm:$0xff]
      %v300 = vld [vmem:[%s262 + $0xa0] sm:$0xff]
      %v301 = vld [vmem:[%s262 + $0xa8] sm:$0xff]
      %v302 = vld [vmem:[%s262 + $0xb0] sm:$0xff]
      %v303 = vld [vmem:[%s262 + $0xb8] sm:$0xff]
      %v304 = vld [vmem:[%s262 + $0xc0] sm:$0xff]
      %v305 = vld [vmem:[%s262 + $0xc8] sm:$0xff]
      %v306 = vld [vmem:[%s262 + $0xd0] sm:$0xff]
      %v307 = vld [vmem:[%s262 + $0xd8] sm:$0xff]
      %v308 = vld [vmem:[%s262 + $0xe0] sm:$0xff]
      %v309 = vld [vmem:[%s262 + $0xe8] sm:$0xff]
      %v310 = vld [vmem:[%s262 + $0xf0] sm:$0xff]
      %v311 = vld [vmem:[%s262 + $0xf8] sm:$0xff]
      %v312 = vld [vmem:[%s262 + $0x100] sm:$0xff]
      %v313 = vld [vmem:[%s262 + $0x108] sm:$0xff]
      %v314 = vld [vmem:[%s262 + $0x110] sm:$0xff]
      %v315 = vld [vmem:[%s262 + $0x118] sm:$0xff]
      %v316 = vld [vmem:[%s262 + $0x120] sm:$0xff]
      %v317 = vld [vmem:[%s262 + $0x128] sm:$0xff]
      %v318 = vld [vmem:[%s262 + $0x130] sm:$0xff]
      %v319 = vld [vmem:[%s262 + $0x138] sm:$0xff]
      %v320 = vld [vmem:[%s262 + $0x140] sm:$0xff]
      %v321 = vld [vmem:[%s262 + $0x148] sm:$0xff]
      %v322 = vld [vmem:[%s262 + $0x150] sm:$0xff]
      %v323 = vld [vmem:[%s262 + $0x158] sm:$0xff]
      %v324 = vld [vmem:[%s262 + $0x160] sm:$0xff]
      %v325 = vld [vmem:[%s262 + $0x168] sm:$0xff]
      %v326 = vld [vmem:[%s262 + $0x170] sm:$0xff]
      %v327 = vld [vmem:[%s262 + $0x178] sm:$0xff]
      %v328 = vld [vmem:[%s262 + $0x180] sm:$0xff]
      %v329 = vld [vmem:[%s262 + $0x188] sm:$0xff]
      %v330 = vld [vmem:[%s262 + $0x190] sm:$0xff]
      %v331 = vld [vmem:[%s262 + $0x198] sm:$0xff]
      %v332 = vld [vmem:[%s262 + $0x1a0] sm:$0xff]
      %v333 = vld [vmem:[%s262 + $0x1a8] sm:$0xff]
      %v334 = vld [vmem:[%s262 + $0x1b0] sm:$0xff]
      %v335 = vld [vmem:[%s262 + $0x1b8] sm:$0xff]
      %v336 = vld [vmem:[%s262 + $0x1c0] sm:$0xff]
      %v337 = vld [vmem:[%s262 + $0x1c8] sm:$0xff]
      %v338 = vld [vmem:[%s262 + $0x1d0] sm:$0xff]
      %v339 = vld [vmem:[%s262 + $0x1d8] sm:$0xff]
      %v340 = vld [vmem:[%s262 + $0x1e0] sm:$0xff]
      %v341 = vld [vmem:[%s262 + $0x1e8] sm:$0xff]
      %v342 = vld [vmem:[%s262 + $0x1f0] sm:$0xff]
      %v343 = vld [vmem:[%s262 + $0x1f8] sm:$0xff]
      %v344 = vld [vmem:[%s262 + $0x200] sm:$0xff]
      %v345 = vld [vmem:[%s262 + $0x208] sm:$0xff]
      %v346 = vld [vmem:[%s262 + $0x210] sm:$0xff]
      %v347 = vld [vmem:[%s262 + $0x218] sm:$0xff]
      %v348 = vld [vmem:[%s262 + $0x220] sm:$0xff]
      %v349 = vld [vmem:[%s262 + $0x228] sm:$0xff]
      %v350 = vld [vmem:[%s262 + $0x230] sm:$0xff]
      %v351 = vld [vmem:[%s262 + $0x238] sm:$0xff]
      %v352 = vld [vmem:[%s262 + $0x240] sm:$0xff]
      %v353 = vld [vmem:[%s262 + $0x248] sm:$0xff]
      %v354 = vld [vmem:[%s262 + $0x250] sm:$0xff]
      %v355 = vld [vmem:[%s262 + $0x258] sm:$0xff]
      %v356 = vld [vmem:[%s262 + $0x260] sm:$0xff]
      %v357 = vld [vmem:[%s262 + $0x268] sm:$0xff]
      %v358 = vld [vmem:[%s262 + $0x270] sm:$0xff]
      %v359 = vld [vmem:[%s262 + $0x278] sm:$0xff]
      %v360 = vld [vmem:[%s262 + $0x280] sm:$0xff]
      %v361 = vld [vmem:[%s262 + $0x288] sm:$0xff]
      %v362 = vld [vmem:[%s262 + $0x290] sm:$0xff]
      %v363 = vld [vmem:[%s262 + $0x298] sm:$0xff]
      %v364 = vld [vmem:[%s262 + $0x2a0] sm:$0xff]
      %v365 = vld [vmem:[%s262 + $0x2a8] sm:$0xff]
      %v366 = vld [vmem:[%s262 + $0x2b0] sm:$0xff]
      %v367 = vld [vmem:[%s262 + $0x2b8] sm:$0xff]
      %v368 = vld [vmem:[%s262 + $0x2c0] sm:$0xff]
      %v369 = vld [vmem:[%s262 + $0x2c8] sm:$0xff]
      %v370 = vld [vmem:[%s262 + $0x2d0] sm:$0xff]
      %v371 = vld [vmem:[%s262 + $0x2d8] sm:$0xff]
      %v372 = vld [vmem:[%s262 + $0x2e0] sm:$0xff]
      %v373 = vld [vmem:[%s262 + $0x2e8] sm:$0xff]
      %v374 = vld [vmem:[%s262 + $0x2f0] sm:$0xff]
      %v375 = vld [vmem:[%s262 + $0x2f8] sm:$0xff]
      %v376 = vld [vmem:[%s262 + $0x300] sm:$0xff]
      %v377 = vld [vmem:[%s262 + $0x308] sm:$0xff]
      %v378 = vld [vmem:[%s262 + $0x310] sm:$0xff]
      %v379 = vld [vmem:[%s262 + $0x318] sm:$0xff]
      %v380 = vld [vmem:[%s262 + $0x320] sm:$0xff]
      %v381 = vld [vmem:[%s262 + $0x328] sm:$0xff]
      %v382 = vld [vmem:[%s262 + $0x330] sm:$0xff]
      %v383 = vld [vmem:[%s262 + $0x338] sm:$0xff]
      %v384 = vld [vmem:[%s262 + $0x340] sm:$0xff]
      %v385 = vld [vmem:[%s262 + $0x348] sm:$0xff]
      %v386 = vld [vmem:[%s262 + $0x350] sm:$0xff]
      %v387 = vld [vmem:[%s262 + $0x358] sm:$0xff]
      %v388 = vld [vmem:[%s262 + $0x360] sm:$0xff]
      %v389 = vld [vmem:[%s262 + $0x368] sm:$0xff]
      %v390 = vld [vmem:[%s262 + $0x370] sm:$0xff]
      %v391 = vld [vmem:[%s262 + $0x378] sm:$0xff]
      %v392 = vld [vmem:[%s262 + $0x380] sm:$0xff]
      %v393 = vld [vmem:[%s262 + $0x388] sm:$0xff]
      %v394 = vld [vmem:[%s262 + $0x390] sm:$0xff]
      %v395 = vld [vmem:[%s262 + $0x398] sm:$0xff]
      %v396 = vld [vmem:[%s262 + $0x3a0] sm:$0xff]
      %v397 = vld [vmem:[%s262 + $0x3a8] sm:$0xff]
      %v398 = vld [vmem:[%s262 + $0x3b0] sm:$0xff]
      %v399 = vld [vmem:[%s262 + $0x3b8] sm:$0xff]
      %v400 = vld [vmem:[%s262 + $0x3c0] sm:$0xff]
      %v401 = vld [vmem:[%s262 + $0x3c8] sm:$0xff]
      %v402 = vld [vmem:[%s262 + $0x3d0] sm:$0xff]
      %v403 = vld [vmem:[%s262 + $0x3d8] sm:$0xff]
      %v404 = vld [vmem:[%s262 + $0x3e0] sm:$0xff]
      %v405 = vld [vmem:[%s262 + $0x3e8] sm:$0xff]
      %v406 = vld [vmem:[%s262 + $0x3f0] sm:$0xff]
      %v407 = vld [vmem:[%s262 + $0x3f8] sm:$0xff]
      %v408 = vld [vmem:[%s262 + $0x400] sm:$0xff]
      %v409 = vld [vmem:[%s262 + $0x408] sm:$0xff]
      %v410 = vld [vmem:[%s262 + $0x410] sm:$0xff]
      %v411 = vld [vmem:[%s262 + $0x418] sm:$0xff]
      %v412 = vld [vmem:[%s262 + $0x420] sm:$0xff]
      %v413 = vld [vmem:[%s262 + $0x428] sm:$0xff]
      %v414 = vld [vmem:[%s262 + $0x430] sm:$0xff]
      %v415 = vld [vmem:[%s262 + $0x438] sm:$0xff]
      %v416 = vld [vmem:[%s262 + $0x440] sm:$0xff]
      %v417 = vld [vmem:[%s262 + $0x448] sm:$0xff]
      %v418 = vld [vmem:[%s262 + $0x450] sm:$0xff]
      %v419 = vld [vmem:[%s262 + $0x458] sm:$0xff]
      %v420 = vld [vmem:[%s262 + $0x460] sm:$0xff]
      %v421 = vld [vmem:[%s262 + $0x468] sm:$0xff]
      %v422 = vld [vmem:[%s262 + $0x470] sm:$0xff]
      %v423 = vld [vmem:[%s262 + $0x478] sm:$0xff]
      %v424 = vld [vmem:[%s262 + $0x480] sm:$0xff]
      %v425 = vld [vmem:[%s262 + $0x488] sm:$0xff]
      %v426 = vld [vmem:[%s262 + $0x490] sm:$0xff]
      %v427 = vld [vmem:[%s262 + $0x498] sm:$0xff]
      %v428 = vld [vmem:[%s262 + $0x4a0] sm:$0xff]
      %v429 = vld [vmem:[%s262 + $0x4a8] sm:$0xff]
      %v430 = vld [vmem:[%s262 + $0x4b0] sm:$0xff]
      %v431 = vld [vmem:[%s262 + $0x4b8] sm:$0xff]
      %v432 = vld [vmem:[%s262 + $0x4c0] sm:$0xff]
      %v433 = vld [vmem:[%s262 + $0x4c8] sm:$0xff]
      %v434 = vld [vmem:[%s262 + $0x4d0] sm:$0xff]
      %v435 = vld [vmem:[%s262 + $0x4d8] sm:$0xff]
      %v436 = vld [vmem:[%s262 + $0x4e0] sm:$0xff]
      %v437 = vld [vmem:[%s262 + $0x4e8] sm:$0xff]
      %v438 = vld [vmem:[%s262 + $0x4f0] sm:$0xff]
      %v439 = vld [vmem:[%s262 + $0x4f8] sm:$0xff]
      %v440 = vld [vmem:[%s262 + $0x500] sm:$0xff]
      %v441 = vld [vmem:[%s262 + $0x508] sm:$0xff]
      %v442 = vld [vmem:[%s262 + $0x510] sm:$0xff]
      %v443 = vld [vmem:[%s262 + $0x518] sm:$0xff]
      %v444 = vld [vmem:[%s262 + $0x520] sm:$0xff]
      %v445 = vld [vmem:[%s262 + $0x528] sm:$0xff]
      %v446 = vld [vmem:[%s262 + $0x530] sm:$0xff]
      %v447 = vld [vmem:[%s262 + $0x538] sm:$0xff]
      %v448 = vld [vmem:[%s262 + $0x540] sm:$0xff]
      %v449 = vld [vmem:[%s262 + $0x548] sm:$0xff]
      %v450 = vld [vmem:[%s262 + $0x550] sm:$0xff]
      %v451 = vld [vmem:[%s262 + $0x558] sm:$0xff]
      %v452 = vld [vmem:[%s262 + $0x560] sm:$0xff]
      %v453 = vld [vmem:[%s262 + $0x568] sm:$0xff]
      %v454 = vld [vmem:[%s262 + $0x570] sm:$0xff]
      %v455 = vld [vmem:[%s262 + $0x578] sm:$0xff]
      %v456 = vld [vmem:[%s262 + $0x580] sm:$0xff]
      %v457 = vld [vmem:[%s262 + $0x588] sm:$0xff]
      %v458 = vld [vmem:[%s262 + $0x590] sm:$0xff]
      %v459 = vld [vmem:[%s262 + $0x598] sm:$0xff]
      %v460 = vld [vmem:[%s262 + $0x5a0] sm:$0xff]
      %v461 = vld [vmem:[%s262 + $0x5a8] sm:$0xff]
      %v462 = vld [vmem:[%s262 + $0x5b0] sm:$0xff]
      %v463 = vld [vmem:[%s262 + $0x5b8] sm:$0xff]
      %v464 = vld [vmem:[%s262 + $0x5c0] sm:$0xff]
      %v465 = vld [vmem:[%s262 + $0x5c8] sm:$0xff]
      %v466 = vld [vmem:[%s262 + $0x5d0] sm:$0xff]
      %v467 = vld [vmem:[%s262 + $0x5d8] sm:$0xff]
      %v468 = vld [vmem:[%s262 + $0x5e0] sm:$0xff]
      %v469 = vld [vmem:[%s262 + $0x5e8] sm:$0xff]
      %v470 = vld [vmem:[%s262 + $0x5f0] sm:$0xff]
      %v471 = vld [vmem:[%s262 + $0x5f8] sm:$0xff]
      %v472 = vld [vmem:[%s262 + $0x600] sm:$0xff]
      %v473 = vld [vmem:[%s262 + $0x608] sm:$0xff]
      %v474 = vld [vmem:[%s262 + $0x610] sm:$0xff]
      %v475 = vld [vmem:[%s262 + $0x618] sm:$0xff]
      %v476 = vld [vmem:[%s262 + $0x620] sm:$0xff]
      %v477 = vld [vmem:[%s262 + $0x628] sm:$0xff]
      %v478 = vld [vmem:[%s262 + $0x630] sm:$0xff]
      %v479 = vld [vmem:[%s262 + $0x638] sm:$0xff]
      %v480 = vld [vmem:[%s262 + $0x640] sm:$0xff]
      %v481 = vld [vmem:[%s262 + $0x648] sm:$0xff]
      %v482 = vld [vmem:[%s262 + $0x650] sm:$0xff]
      %v483 = vld [vmem:[%s262 + $0x658] sm:$0xff]
      %v484 = vld [vmem:[%s262 + $0x660] sm:$0xff]
      %v485 = vld [vmem:[%s262 + $0x668] sm:$0xff]
      %v486 = vld [vmem:[%s262 + $0x670] sm:$0xff]
      %v487 = vld [vmem:[%s262 + $0x678] sm:$0xff]
      %v488 = vld [vmem:[%s262 + $0x680] sm:$0xff]
      %v489 = vld [vmem:[%s262 + $0x688] sm:$0xff]
      %v490 = vld [vmem:[%s262 + $0x690] sm:$0xff]
      %v491 = vld [vmem:[%s262 + $0x698] sm:$0xff]
      %v492 = vld [vmem:[%s262 + $0x6a0] sm:$0xff]
      %v493 = vld [vmem:[%s262 + $0x6a8] sm:$0xff]
      %v494 = vld [vmem:[%s262 + $0x6b0] sm:$0xff]
      %v495 = vld [vmem:[%s262 + $0x6b8] sm:$0xff]
      %v496 = vld [vmem:[%s266] sm:$0xff]
      %v497 = vld [vmem:[%s266 + $0x8] sm:$0xff]
      %v498 = vld [vmem:[%s266 + $0x10] sm:$0xff]
      %v499 = vld [vmem:[%s266 + $0x18] sm:$0xff]
      %v500 = vld [vmem:[%s266 + $0x20] sm:$0xff]
      %v501 = vld [vmem:[%s266 + $0x28] sm:$0xff]
      %v502 = vld [vmem:[%s266 + $0x30] sm:$0x3f]
      %v510 = vperm.slane %v496, 0
      %v511 = vperm.slane %v496, 1
      %v512 = vperm.slane %v496, 2
      %v513 = vperm.slane %v496, 3
      %v514 = vperm.slane %v496, 4
      %v515 = vperm.slane %v496, 5
      %v516 = vperm.slane %v496, 6
      %v517 = vperm.slane %v496, 7
      %v518 = vperm.slane %v497, 0
      %v519 = vperm.slane %v497, 1
      %v520 = vperm.slane %v497, 2
      %v521 = vperm.slane %v497, 3
      %v522 = vperm.slane %v497, 4
      %v523 = vperm.slane %v497, 5
      %v524 = vperm.slane %v497, 6
      %v525 = vperm.slane %v497, 7
      %v526 = vperm.slane %v498, 0
      %v527 = vperm.slane %v498, 1
      %v528 = vperm.slane %v498, 2
      %v529 = vperm.slane %v498, 3
      %v530 = vperm.slane %v498, 4
      %v531 = vperm.slane %v498, 5
      %v532 = vperm.slane %v498, 6
      %v533 = vperm.slane %v498, 7
      %v534 = vperm.slane %v499, 0
      %v535 = vperm.slane %v499, 1
      %v536 = vperm.slane %v499, 2
      %v537 = vperm.slane %v499, 3
      %v538 = vperm.slane %v499, 4
      %v539 = vperm.slane %v499, 5
      %v540 = vperm.slane %v499, 6
      %v541 = vperm.slane %v499, 7
      %v542 = vperm.slane %v500, 0
      %v543 = vperm.slane %v500, 1
      %v544 = vperm.slane %v500, 2
      %v545 = vperm.slane %v500, 3
      %v546 = vperm.slane %v500, 4
      %v547 = vperm.slane %v500, 5
      %v548 = vperm.slane %v500, 6
      %v549 = vperm.slane %v500, 7
      %v550 = vperm.slane %v501, 0
      %v551 = vperm.slane %v501, 1
      %v552 = vperm.slane %v501, 2
      %v553 = vperm.slane %v501, 3
      %v554 = vperm.slane %v501, 4
      %v555 = vperm.slane %v501, 5
      %v556 = vperm.slane %v501, 6
      %v557 = vperm.slane %v501, 7
      %v558 = vperm.slane %v502, 0
      %v559 = vperm.slane %v502, 1
      %v560 = vperm.slane %v502, 2
      %v561 = vperm.slane %v502, 3
      %v562 = vperm.slane %v502, 4
      %v563 = vperm.slane %v502, 5
      %v834 = vunpack.c.l.b16 %v280
      %v835 = vunpack.c.h.b16 %v280
      %v836 = vunpack.c.l.b16 %v281
      %v837 = vunpack.c.h.b16 %v281
      %v838 = vunpack.c.l.b16 %v282
      %v839 = vunpack.c.h.b16 %v282
      %v840 = vunpack.c.l.b16 %v283
      %v841 = vunpack.c.h.b16 %v283
      %v842 = vunpack.c.l.b16 %v284
      %v843 = vunpack.c.h.b16 %v284
      %v844 = vunpack.c.l.b16 %v285
      %v845 = vunpack.c.h.b16 %v285
      %v846 = vunpack.c.l.b16 %v286
      %v847 = vunpack.c.h.b16 %v286
      %v848 = vunpack.c.l.b16 %v287
      %v849 = vunpack.c.h.b16 %v287
      %v850 = vunpack.c.l.b16 %v288
      %v851 = vunpack.c.h.b16 %v288
      %v852 = vunpack.c.l.b16 %v289
      %v853 = vunpack.c.h.b16 %v289
      %v854 = vunpack.c.l.b16 %v290
      %v855 = vunpack.c.h.b16 %v290
      %v856 = vunpack.c.l.b16 %v291
      %v857 = vunpack.c.h.b16 %v291
      %v858 = vunpack.c.l.b16 %v292
      %v859 = vunpack.c.h.b16 %v292
      %v860 = vunpack.c.l.b16 %v293
      %v861 = vunpack.c.h.b16 %v293
      %v862 = vunpack.c.l.b16 %v294
      %v863 = vunpack.c.h.b16 %v294
      %v864 = vunpack.c.l.b16 %v295
      %v865 = vunpack.c.h.b16 %v295
      %v866 = vunpack.c.l.b16 %v296
      %v867 = vunpack.c.h.b16 %v296
      %v868 = vunpack.c.l.b16 %v297
      %v869 = vunpack.c.h.b16 %v297
      %v870 = vunpack.c.l.b16 %v298
      %v871 = vunpack.c.h.b16 %v298
      %v872 = vunpack.c.l.b16 %v299
      %v873 = vunpack.c.h.b16 %v299
      %v874 = vunpack.c.l.b16 %v300
      %v875 = vunpack.c.h.b16 %v300
      %v876 = vunpack.c.l.b16 %v301
      %v877 = vunpack.c.h.b16 %v301
      %v878 = vunpack.c.l.b16 %v302
      %v879 = vunpack.c.h.b16 %v302
      %v880 = vunpack.c.l.b16 %v303
      %v881 = vunpack.c.h.b16 %v303
      %v882 = vunpack.c.l.b16 %v304
      %v883 = vunpack.c.h.b16 %v304
      %v884 = vunpack.c.l.b16 %v305
      %v885 = vunpack.c.h.b16 %v305
      %v886 = vunpack.c.l.b16 %v306
      %v887 = vunpack.c.h.b16 %v306
      %v888 = vunpack.c.l.b16 %v307
      %v889 = vunpack.c.h.b16 %v307
      %v890 = vunpack.c.l.b16 %v308
      %v891 = vunpack.c.h.b16 %v308
      %v892 = vunpack.c.l.b16 %v309
      %v893 = vunpack.c.h.b16 %v309
      %v894 = vunpack.c.l.b16 %v310
      %v895 = vunpack.c.h.b16 %v310
      %v896 = vunpack.c.l.b16 %v311
      %v897 = vunpack.c.h.b16 %v311
      %v898 = vunpack.c.l.b16 %v312
      %v899 = vunpack.c.h.b16 %v312
      %v900 = vunpack.c.l.b16 %v313
      %v901 = vunpack.c.h.b16 %v313
      %v902 = vunpack.c.l.b16 %v314
      %v903 = vunpack.c.h.b16 %v314
      %v904 = vunpack.c.l.b16 %v315
      %v905 = vunpack.c.h.b16 %v315
      %v906 = vunpack.c.l.b16 %v316
      %v907 = vunpack.c.h.b16 %v316
      %v908 = vunpack.c.l.b16 %v317
      %v909 = vunpack.c.h.b16 %v317
      %v910 = vunpack.c.l.b16 %v318
      %v911 = vunpack.c.h.b16 %v318
      %v912 = vunpack.c.l.b16 %v319
      %v913 = vunpack.c.h.b16 %v319
      %v914 = vunpack.c.l.b16 %v320
      %v915 = vunpack.c.h.b16 %v320
      %v916 = vunpack.c.l.b16 %v321
      %v917 = vunpack.c.h.b16 %v321
      %v918 = vunpack.c.l.b16 %v322
      %v919 = vunpack.c.h.b16 %v322
      %v920 = vunpack.c.l.b16 %v323
      %v921 = vunpack.c.h.b16 %v323
      %v922 = vunpack.c.l.b16 %v324
      %v923 = vunpack.c.h.b16 %v324
      %v924 = vunpack.c.l.b16 %v325
      %v925 = vunpack.c.h.b16 %v325
      %v926 = vunpack.c.l.b16 %v326
      %v927 = vunpack.c.h.b16 %v326
      %v928 = vunpack.c.l.b16 %v327
      %v929 = vunpack.c.h.b16 %v327
      %v930 = vunpack.c.l.b16 %v328
      %v931 = vunpack.c.h.b16 %v328
      %v932 = vunpack.c.l.b16 %v329
      %v933 = vunpack.c.h.b16 %v329
      %v934 = vunpack.c.l.b16 %v330
      %v935 = vunpack.c.h.b16 %v330
      %v936 = vunpack.c.l.b16 %v331
      %v937 = vunpack.c.h.b16 %v331
      %v938 = vunpack.c.l.b16 %v332
      %v939 = vunpack.c.h.b16 %v332
      %v940 = vunpack.c.l.b16 %v333
      %v941 = vunpack.c.h.b16 %v333
      %v942 = vunpack.c.l.b16 %v334
      %v943 = vunpack.c.h.b16 %v334
      %v944 = vunpack.c.l.b16 %v335
      %v945 = vunpack.c.h.b16 %v335
      %v946 = vunpack.c.l.b16 %v336
      %v947 = vunpack.c.h.b16 %v336
      %v948 = vunpack.c.l.b16 %v337
      %v949 = vunpack.c.h.b16 %v337
      %v950 = vunpack.c.l.b16 %v338
      %v951 = vunpack.c.h.b16 %v338
      %v952 = vunpack.c.l.b16 %v339
      %v953 = vunpack.c.h.b16 %v339
      %v954 = vunpack.c.l.b16 %v340
      %v955 = vunpack.c.h.b16 %v340
      %v956 = vunpack.c.l.b16 %v341
      %v957 = vunpack.c.h.b16 %v341
      %v958 = vunpack.c.l.b16 %v342
      %v959 = vunpack.c.h.b16 %v342
      %v960 = vunpack.c.l.b16 %v343
      %v961 = vunpack.c.h.b16 %v343
      %v962 = vunpack.c.l.b16 %v344
      %v963 = vunpack.c.h.b16 %v344
      %v964 = vunpack.c.l.b16 %v345
      %v965 = vunpack.c.h.b16 %v345
      %v966 = vunpack.c.l.b16 %v346
      %v967 = vunpack.c.h.b16 %v346
      %v968 = vunpack.c.l.b16 %v347
      %v969 = vunpack.c.h.b16 %v347
      %v970 = vunpack.c.l.b16 %v348
      %v971 = vunpack.c.h.b16 %v348
      %v972 = vunpack.c.l.b16 %v349
      %v973 = vunpack.c.h.b16 %v349
      %v974 = vunpack.c.l.b16 %v350
      %v975 = vunpack.c.h.b16 %v350
      %v976 = vunpack.c.l.b16 %v351
      %v977 = vunpack.c.h.b16 %v351
      %v978 = vunpack.c.l.b16 %v352
      %v979 = vunpack.c.h.b16 %v352
      %v980 = vunpack.c.l.b16 %v353
      %v981 = vunpack.c.h.b16 %v353
      %v982 = vunpack.c.l.b16 %v354
      %v983 = vunpack.c.h.b16 %v354
      %v984 = vunpack.c.l.b16 %v355
      %v985 = vunpack.c.h.b16 %v355
      %v986 = vunpack.c.l.b16 %v356
      %v987 = vunpack.c.h.b16 %v356
      %v988 = vunpack.c.l.b16 %v357
      %v989 = vunpack.c.h.b16 %v357
      %v990 = vunpack.c.l.b16 %v358
      %v991 = vunpack.c.h.b16 %v358
      %v992 = vunpack.c.l.b16 %v359
      %v993 = vunpack.c.h.b16 %v359
      %v994 = vunpack.c.l.b16 %v360
      %v995 = vunpack.c.h.b16 %v360
      %v996 = vunpack.c.l.b16 %v361
      %v997 = vunpack.c.h.b16 %v361
      %v998 = vunpack.c.l.b16 %v362
      %v999 = vunpack.c.h.b16 %v362
      %v1000 = vunpack.c.l.b16 %v363
      %v1001 = vunpack.c.h.b16 %v363
      %v1002 = vunpack.c.l.b16 %v364
      %v1003 = vunpack.c.h.b16 %v364
      %v1004 = vunpack.c.l.b16 %v365
      %v1005 = vunpack.c.h.b16 %v365
      %v1006 = vunpack.c.l.b16 %v366
      %v1007 = vunpack.c.h.b16 %v366
      %v1008 = vunpack.c.l.b16 %v367
      %v1009 = vunpack.c.h.b16 %v367
      %v1010 = vunpack.c.l.b16 %v368
      %v1011 = vunpack.c.h.b16 %v368
      %v1012 = vunpack.c.l.b16 %v369
      %v1013 = vunpack.c.h.b16 %v369
      %v1014 = vunpack.c.l.b16 %v370
      %v1015 = vunpack.c.h.b16 %v370
      %v1016 = vunpack.c.l.b16 %v371
      %v1017 = vunpack.c.h.b16 %v371
      %v1018 = vunpack.c.l.b16 %v372
      %v1019 = vunpack.c.h.b16 %v372
      %v1020 = vunpack.c.l.b16 %v373
      %v1021 = vunpack.c.h.b16 %v373
      %v1022 = vunpack.c.l.b16 %v374
      %v1023 = vunpack.c.h.b16 %v374
      %v1024 = vunpack.c.l.b16 %v375
      %v1025 = vunpack.c.h.b16 %v375
      %v1026 = vunpack.c.l.b16 %v376
      %v1027 = vunpack.c.h.b16 %v376
      %v1028 = vunpack.c.l.b16 %v377
      %v1029 = vunpack.c.h.b16 %v377
      %v1030 = vunpack.c.l.b16 %v378
      %v1031 = vunpack.c.h.b16 %v378
      %v1032 = vunpack.c.l.b16 %v379
      %v1033 = vunpack.c.h.b16 %v379
      %v1034 = vunpack.c.l.b16 %v380
      %v1035 = vunpack.c.h.b16 %v380
      %v1036 = vunpack.c.l.b16 %v381
      %v1037 = vunpack.c.h.b16 %v381
      %v1038 = vunpack.c.l.b16 %v382
      %v1039 = vunpack.c.h.b16 %v382
      %v1040 = vunpack.c.l.b16 %v383
      %v1041 = vunpack.c.h.b16 %v383
      %v1042 = vunpack.c.l.b16 %v384
      %v1043 = vunpack.c.h.b16 %v384
      %v1044 = vunpack.c.l.b16 %v385
      %v1045 = vunpack.c.h.b16 %v385
      %v1046 = vunpack.c.l.b16 %v386
      %v1047 = vunpack.c.h.b16 %v386
      %v1048 = vunpack.c.l.b16 %v387
      %v1049 = vunpack.c.h.b16 %v387
      %v1050 = vunpack.c.l.b16 %v388
      %v1051 = vunpack.c.h.b16 %v388
      %v1052 = vunpack.c.l.b16 %v389
      %v1053 = vunpack.c.h.b16 %v389
      %v1054 = vunpack.c.l.b16 %v390
      %v1055 = vunpack.c.h.b16 %v390
      %v1056 = vunpack.c.l.b16 %v391
      %v1057 = vunpack.c.h.b16 %v391
      %v1058 = vunpack.c.l.b16 %v392
      %v1059 = vunpack.c.h.b16 %v392
      %v1060 = vunpack.c.l.b16 %v393
      %v1061 = vunpack.c.h.b16 %v393
      %v1062 = vunpack.c.l.b16 %v394
      %v1063 = vunpack.c.h.b16 %v394
      %v1064 = vunpack.c.l.b16 %v395
      %v1065 = vunpack.c.h.b16 %v395
      %v1066 = vunpack.c.l.b16 %v396
      %v1067 = vunpack.c.h.b16 %v396
      %v1068 = vunpack.c.l.b16 %v397
      %v1069 = vunpack.c.h.b16 %v397
      %v1070 = vunpack.c.l.b16 %v398
      %v1071 = vunpack.c.h.b16 %v398
      %v1072 = vunpack.c.l.b16 %v399
      %v1073 = vunpack.c.h.b16 %v399
      %v1074 = vunpack.c.l.b16 %v400
      %v1075 = vunpack.c.h.b16 %v400
      %v1076 = vunpack.c.l.b16 %v401
      %v1077 = vunpack.c.h.b16 %v401
      %v1078 = vunpack.c.l.b16 %v402
      %v1079 = vunpack.c.h.b16 %v402
      %v1080 = vunpack.c.l.b16 %v403
      %v1081 = vunpack.c.h.b16 %v403
      %v1082 = vunpack.c.l.b16 %v404
      %v1083 = vunpack.c.h.b16 %v404
      %v1084 = vunpack.c.l.b16 %v405
      %v1085 = vunpack.c.h.b16 %v405
      %v1086 = vunpack.c.l.b16 %v406
      %v1087 = vunpack.c.h.b16 %v406
      %v1088 = vunpack.c.l.b16 %v407
      %v1089 = vunpack.c.h.b16 %v407
      %v1090 = vunpack.c.l.b16 %v408
      %v1091 = vunpack.c.h.b16 %v408
      %v1092 = vunpack.c.l.b16 %v409
      %v1093 = vunpack.c.h.b16 %v409
      %v1094 = vunpack.c.l.b16 %v410
      %v1095 = vunpack.c.h.b16 %v410
      %v1096 = vunpack.c.l.b16 %v411
      %v1097 = vunpack.c.h.b16 %v411
      %v1098 = vunpack.c.l.b16 %v412
      %v1099 = vunpack.c.h.b16 %v412
      %v1100 = vunpack.c.l.b16 %v413
      %v1101 = vunpack.c.h.b16 %v413
      %v1102 = vunpack.c.l.b16 %v414
      %v1103 = vunpack.c.h.b16 %v414
      %v1104 = vunpack.c.l.b16 %v415
      %v1105 = vunpack.c.h.b16 %v415
      %v1106 = vunpack.c.l.b16 %v416
      %v1107 = vunpack.c.h.b16 %v416
      %v1108 = vunpack.c.l.b16 %v417
      %v1109 = vunpack.c.h.b16 %v417
      %v1110 = vunpack.c.l.b16 %v418
      %v1111 = vunpack.c.h.b16 %v418
      %v1112 = vunpack.c.l.b16 %v419
      %v1113 = vunpack.c.h.b16 %v419
      %v1114 = vunpack.c.l.b16 %v420
      %v1115 = vunpack.c.h.b16 %v420
      %v1116 = vunpack.c.l.b16 %v421
      %v1117 = vunpack.c.h.b16 %v421
      %v1118 = vunpack.c.l.b16 %v422
      %v1119 = vunpack.c.h.b16 %v422
      %v1120 = vunpack.c.l.b16 %v423
      %v1121 = vunpack.c.h.b16 %v423
      %v1122 = vunpack.c.l.b16 %v424
      %v1123 = vunpack.c.h.b16 %v424
      %v1124 = vunpack.c.l.b16 %v425
      %v1125 = vunpack.c.h.b16 %v425
      %v1126 = vunpack.c.l.b16 %v426
      %v1127 = vunpack.c.h.b16 %v426
      %v1128 = vunpack.c.l.b16 %v427
      %v1129 = vunpack.c.h.b16 %v427
      %v1130 = vunpack.c.l.b16 %v428
      %v1131 = vunpack.c.h.b16 %v428
      %v1132 = vunpack.c.l.b16 %v429
      %v1133 = vunpack.c.h.b16 %v429
      %v1134 = vunpack.c.l.b16 %v430
      %v1135 = vunpack.c.h.b16 %v430
      %v1136 = vunpack.c.l.b16 %v431
      %v1137 = vunpack.c.h.b16 %v431
      %v1138 = vunpack.c.l.b16 %v432
      %v1139 = vunpack.c.h.b16 %v432
      %v1140 = vunpack.c.l.b16 %v433
      %v1141 = vunpack.c.h.b16 %v433
      %v1142 = vunpack.c.l.b16 %v434
      %v1143 = vunpack.c.h.b16 %v434
      %v1144 = vunpack.c.l.b16 %v435
      %v1145 = vunpack.c.h.b16 %v435
      %v1146 = vunpack.c.l.b16 %v436
      %v1147 = vunpack.c.h.b16 %v436
      %v1148 = vunpack.c.l.b16 %v437
      %v1149 = vunpack.c.h.b16 %v437
      %v1150 = vunpack.c.l.b16 %v438
      %v1151 = vunpack.c.h.b16 %v438
      %v1152 = vunpack.c.l.b16 %v439
      %v1153 = vunpack.c.h.b16 %v439
      %v1154 = vunpack.c.l.b16 %v440
      %v1155 = vunpack.c.h.b16 %v440
      %v1156 = vunpack.c.l.b16 %v441
      %v1157 = vunpack.c.h.b16 %v441
      %v1158 = vunpack.c.l.b16 %v442
      %v1159 = vunpack.c.h.b16 %v442
      %v1160 = vunpack.c.l.b16 %v443
      %v1161 = vunpack.c.h.b16 %v443
      %v1162 = vunpack.c.l.b16 %v444
      %v1163 = vunpack.c.h.b16 %v444
      %v1164 = vunpack.c.l.b16 %v445
      %v1165 = vunpack.c.h.b16 %v445
      %v1166 = vunpack.c.l.b16 %v446
      %v1167 = vunpack.c.h.b16 %v446
      %v1168 = vunpack.c.l.b16 %v447
      %v1169 = vunpack.c.h.b16 %v447
      %v1170 = vunpack.c.l.b16 %v448
      %v1171 = vunpack.c.h.b16 %v448
      %v1172 = vunpack.c.l.b16 %v449
      %v1173 = vunpack.c.h.b16 %v449
      %v1174 = vunpack.c.l.b16 %v450
      %v1175 = vunpack.c.h.b16 %v450
      %v1176 = vunpack.c.l.b16 %v451
      %v1177 = vunpack.c.h.b16 %v451
      %v1178 = vunpack.c.l.b16 %v452
      %v1179 = vunpack.c.h.b16 %v452
      %v1180 = vunpack.c.l.b16 %v453
      %v1181 = vunpack.c.h.b16 %v453
      %v1182 = vunpack.c.l.b16 %v454
      %v1183 = vunpack.c.h.b16 %v454
      %v1184 = vunpack.c.l.b16 %v455
      %v1185 = vunpack.c.h.b16 %v455
      %v1186 = vunpack.c.l.b16 %v456
      %v1187 = vunpack.c.h.b16 %v456
      %v1188 = vunpack.c.l.b16 %v457
      %v1189 = vunpack.c.h.b16 %v457
      %v1190 = vunpack.c.l.b16 %v458
      %v1191 = vunpack.c.h.b16 %v458
      %v1192 = vunpack.c.l.b16 %v459
      %v1193 = vunpack.c.h.b16 %v459
      %v1194 = vunpack.c.l.b16 %v460
      %v1195 = vunpack.c.h.b16 %v460
      %v1196 = vunpack.c.l.b16 %v461
      %v1197 = vunpack.c.h.b16 %v461
      %v1198 = vunpack.c.l.b16 %v462
      %v1199 = vunpack.c.h.b16 %v462
      %v1200 = vunpack.c.l.b16 %v463
      %v1201 = vunpack.c.h.b16 %v463
      %v1202 = vunpack.c.l.b16 %v464
      %v1203 = vunpack.c.h.b16 %v464
      %v1204 = vunpack.c.l.b16 %v465
      %v1205 = vunpack.c.h.b16 %v465
      %v1206 = vunpack.c.l.b16 %v466
      %v1207 = vunpack.c.h.b16 %v466
      %v1208 = vunpack.c.l.b16 %v467
      %v1209 = vunpack.c.h.b16 %v467
      %v1210 = vunpack.c.l.b16 %v468
      %v1211 = vunpack.c.h.b16 %v468
      %v1212 = vunpack.c.l.b16 %v469
      %v1213 = vunpack.c.h.b16 %v469
      %v1214 = vunpack.c.l.b16 %v470
      %v1215 = vunpack.c.h.b16 %v470
      %v1216 = vunpack.c.l.b16 %v471
      %v1217 = vunpack.c.h.b16 %v471
      %v1218 = vunpack.c.l.b16 %v472
      %v1219 = vunpack.c.h.b16 %v472
      %v1220 = vunpack.c.l.b16 %v473
      %v1221 = vunpack.c.h.b16 %v473
      %v1222 = vunpack.c.l.b16 %v474
      %v1223 = vunpack.c.h.b16 %v474
      %v1224 = vunpack.c.l.b16 %v475
      %v1225 = vunpack.c.h.b16 %v475
      %v1226 = vunpack.c.l.b16 %v476
      %v1227 = vunpack.c.h.b16 %v476
      %v1228 = vunpack.c.l.b16 %v477
      %v1229 = vunpack.c.h.b16 %v477
      %v1230 = vunpack.c.l.b16 %v478
      %v1231 = vunpack.c.h.b16 %v478
      %v1232 = vunpack.c.l.b16 %v479
      %v1233 = vunpack.c.h.b16 %v479
      %v1234 = vunpack.c.l.b16 %v480
      %v1235 = vunpack.c.h.b16 %v480
      %v1236 = vunpack.c.l.b16 %v481
      %v1237 = vunpack.c.h.b16 %v481
      %v1238 = vunpack.c.l.b16 %v482
      %v1239 = vunpack.c.h.b16 %v482
      %v1240 = vunpack.c.l.b16 %v483
      %v1241 = vunpack.c.h.b16 %v483
      %v1242 = vunpack.c.l.b16 %v484
      %v1243 = vunpack.c.h.b16 %v484
      %v1244 = vunpack.c.l.b16 %v485
      %v1245 = vunpack.c.h.b16 %v485
      %v1246 = vunpack.c.l.b16 %v486
      %v1247 = vunpack.c.h.b16 %v486
      %v1248 = vunpack.c.l.b16 %v487
      %v1249 = vunpack.c.h.b16 %v487
      %v1250 = vunpack.c.l.b16 %v488
      %v1251 = vunpack.c.h.b16 %v488
      %v1252 = vunpack.c.l.b16 %v489
      %v1253 = vunpack.c.h.b16 %v489
      %v1254 = vunpack.c.l.b16 %v490
      %v1255 = vunpack.c.h.b16 %v490
      %v1256 = vunpack.c.l.b16 %v491
      %v1257 = vunpack.c.h.b16 %v491
      %v1258 = vunpack.c.l.b16 %v492
      %v1259 = vunpack.c.h.b16 %v492
      %v1260 = vunpack.c.l.b16 %v493
      %v1261 = vunpack.c.h.b16 %v493
      %v1262 = vunpack.c.l.b16 %v494
      %v1263 = vunpack.c.h.b16 %v494
      %v1264 = vunpack.c.l.b16 %v495
      %v1265 = vunpack.c.h.b16 %v495
      %v1266 = vpack.c.b16 %v888, %v834
      %v1267 = vpack.c.b16 %v889, %v835
      %v1268 = vpack.c.b16 %v890, %v836
      %v1269 = vpack.c.b16 %v891, %v837
      %v1270 = vpack.c.b16 %v892, %v838
      %v1271 = vpack.c.b16 %v893, %v839
      %v1272 = vpack.c.b16 %v894, %v840
      %v1273 = vpack.c.b16 %v895, %v841
      %v1274 = vpack.c.b16 %v896, %v842
      %v1275 = vpack.c.b16 %v897, %v843
      %v1276 = vpack.c.b16 %v898, %v844
      %v1277 = vpack.c.b16 %v899, %v845
      %v1278 = vpack.c.b16 %v900, %v846
      %v1279 = vpack.c.b16 %v901, %v847
      %v1280 = vpack.c.b16 %v902, %v848
      %v1281 = vpack.c.b16 %v903, %v849
      %v1282 = vpack.c.b16 %v904, %v850
      %v1283 = vpack.c.b16 %v905, %v851
      %v1284 = vpack.c.b16 %v906, %v852
      %v1285 = vpack.c.b16 %v907, %v853
      %v1286 = vpack.c.b16 %v908, %v854
      %v1287 = vpack.c.b16 %v909, %v855
      %v1288 = vpack.c.b16 %v910, %v856
      %v1289 = vpack.c.b16 %v911, %v857
      %v1290 = vpack.c.b16 %v912, %v858
      %v1291 = vpack.c.b16 %v913, %v859
      %v1292 = vpack.c.b16 %v914, %v860
      %v1293 = vpack.c.b16 %v915, %v861
      %v1294 = vpack.c.b16 %v916, %v862
      %v1295 = vpack.c.b16 %v917, %v863
      %v1296 = vpack.c.b16 %v918, %v864
      %v1297 = vpack.c.b16 %v919, %v865
      %v1298 = vpack.c.b16 %v920, %v866
      %v1299 = vpack.c.b16 %v921, %v867
      %v1300 = vpack.c.b16 %v922, %v868
      %v1301 = vpack.c.b16 %v923, %v869
      %v1302 = vpack.c.b16 %v924, %v870
      %v1303 = vpack.c.b16 %v925, %v871
      %v1304 = vpack.c.b16 %v926, %v872
      %v1305 = vpack.c.b16 %v927, %v873
      %v1306 = vpack.c.b16 %v928, %v874
      %v1307 = vpack.c.b16 %v929, %v875
      %v1308 = vpack.c.b16 %v930, %v876
      %v1309 = vpack.c.b16 %v931, %v877
      %v1310 = vpack.c.b16 %v932, %v878
      %v1311 = vpack.c.b16 %v933, %v879
      %v1312 = vpack.c.b16 %v934, %v880
      %v1313 = vpack.c.b16 %v935, %v881
      %v1314 = vpack.c.b16 %v936, %v882
      %v1315 = vpack.c.b16 %v937, %v883
      %v1316 = vpack.c.b16 %v938, %v884
      %v1317 = vpack.c.b16 %v939, %v885
      %v1318 = vpack.c.b16 %v940, %v886
      %v1319 = vpack.c.b16 %v941, %v887
      %v1320 = vpack.c.b16 %v996, %v942
      %v1321 = vpack.c.b16 %v997, %v943
      %v1322 = vpack.c.b16 %v998, %v944
      %v1323 = vpack.c.b16 %v999, %v945
      %v1324 = vpack.c.b16 %v1000, %v946
      %v1325 = vpack.c.b16 %v1001, %v947
      %v1326 = vpack.c.b16 %v1002, %v948
      %v1327 = vpack.c.b16 %v1003, %v949
      %v1328 = vpack.c.b16 %v1004, %v950
      %v1329 = vpack.c.b16 %v1005, %v951
      %v1330 = vpack.c.b16 %v1006, %v952
      %v1331 = vpack.c.b16 %v1007, %v953
      %v1332 = vpack.c.b16 %v1008, %v954
      %v1333 = vpack.c.b16 %v1009, %v955
      %v1334 = vpack.c.b16 %v1010, %v956
      %v1335 = vpack.c.b16 %v1011, %v957
      %v1336 = vpack.c.b16 %v1012, %v958
      %v1337 = vpack.c.b16 %v1013, %v959
      %v1338 = vpack.c.b16 %v1014, %v960
      %v1339 = vpack.c.b16 %v1015, %v961
      %v1340 = vpack.c.b16 %v1016, %v962
      %v1341 = vpack.c.b16 %v1017, %v963
      %v1342 = vpack.c.b16 %v1018, %v964
      %v1343 = vpack.c.b16 %v1019, %v965
      %v1344 = vpack.c.b16 %v1020, %v966
      %v1345 = vpack.c.b16 %v1021, %v967
      %v1346 = vpack.c.b16 %v1022, %v968
      %v1347 = vpack.c.b16 %v1023, %v969
      %v1348 = vpack.c.b16 %v1024, %v970
      %v1349 = vpack.c.b16 %v1025, %v971
      %v1350 = vpack.c.b16 %v1026, %v972
      %v1351 = vpack.c.b16 %v1027, %v973
      %v1352 = vpack.c.b16 %v1028, %v974
      %v1353 = vpack.c.b16 %v1029, %v975
      %v1354 = vpack.c.b16 %v1030, %v976
      %v1355 = vpack.c.b16 %v1031, %v977
      %v1356 = vpack.c.b16 %v1032, %v978
      %v1357 = vpack.c.b16 %v1033, %v979
      %v1358 = vpack.c.b16 %v1034, %v980
      %v1359 = vpack.c.b16 %v1035, %v981
      %v1360 = vpack.c.b16 %v1036, %v982
      %v1361 = vpack.c.b16 %v1037, %v983
      %v1362 = vpack.c.b16 %v1038, %v984
      %v1363 = vpack.c.b16 %v1039, %v985
      %v1364 = vpack.c.b16 %v1040, %v986
      %v1365 = vpack.c.b16 %v1041, %v987
      %v1366 = vpack.c.b16 %v1042, %v988
      %v1367 = vpack.c.b16 %v1043, %v989
      %v1368 = vpack.c.b16 %v1044, %v990
      %v1369 = vpack.c.b16 %v1045, %v991
      %v1370 = vpack.c.b16 %v1046, %v992
      %v1371 = vpack.c.b16 %v1047, %v993
      %v1372 = vpack.c.b16 %v1048, %v994
      %v1373 = vpack.c.b16 %v1049, %v995
      %v1374 = vpack.c.b16 %v1104, %v1050
      %v1375 = vpack.c.b16 %v1105, %v1051
      %v1376 = vpack.c.b16 %v1106, %v1052
      %v1377 = vpack.c.b16 %v1107, %v1053
      %v1378 = vpack.c.b16 %v1108, %v1054
      %v1379 = vpack.c.b16 %v1109, %v1055
      %v1380 = vpack.c.b16 %v1110, %v1056
      %v1381 = vpack.c.b16 %v1111, %v1057
      %v1382 = vpack.c.b16 %v1112, %v1058
      %v1383 = vpack.c.b16 %v1113, %v1059
      %v1384 = vpack.c.b16 %v1114, %v1060
      %v1385 = vpack.c.b16 %v1115, %v1061
      %v1386 = vpack.c.b16 %v1116, %v1062
      %v1387 = vpack.c.b16 %v1117, %v1063
      %v1388 = vpack.c.b16 %v1118, %v1064
      %v1389 = vpack.c.b16 %v1119, %v1065
      %v1390 = vpack.c.b16 %v1120, %v1066
      %v1391 = vpack.c.b16 %v1121, %v1067
      %v1392 = vpack.c.b16 %v1122, %v1068
      %v1393 = vpack.c.b16 %v1123, %v1069
      %v1394 = vpack.c.b16 %v1124, %v1070
      %v1395 = vpack.c.b16 %v1125, %v1071
      %v1396 = vpack.c.b16 %v1126, %v1072
      %v1397 = vpack.c.b16 %v1127, %v1073
      %v1398 = vpack.c.b16 %v1128, %v1074
      %v1399 = vpack.c.b16 %v1129, %v1075
      %v1400 = vpack.c.b16 %v1130, %v1076
      %v1401 = vpack.c.b16 %v1131, %v1077
      %v1402 = vpack.c.b16 %v1132, %v1078
      %v1403 = vpack.c.b16 %v1133, %v1079
      %v1404 = vpack.c.b16 %v1134, %v1080
      %v1405 = vpack.c.b16 %v1135, %v1081
      %v1406 = vpack.c.b16 %v1136, %v1082
      %v1407 = vpack.c.b16 %v1137, %v1083
      %v1408 = vpack.c.b16 %v1138, %v1084
      %v1409 = vpack.c.b16 %v1139, %v1085
      %v1410 = vpack.c.b16 %v1140, %v1086
      %v1411 = vpack.c.b16 %v1141, %v1087
      %v1412 = vpack.c.b16 %v1142, %v1088
      %v1413 = vpack.c.b16 %v1143, %v1089
      %v1414 = vpack.c.b16 %v1144, %v1090
      %v1415 = vpack.c.b16 %v1145, %v1091
      %v1416 = vpack.c.b16 %v1146, %v1092
      %v1417 = vpack.c.b16 %v1147, %v1093
      %v1418 = vpack.c.b16 %v1148, %v1094
      %v1419 = vpack.c.b16 %v1149, %v1095
      %v1420 = vpack.c.b16 %v1150, %v1096
      %v1421 = vpack.c.b16 %v1151, %v1097
      %v1422 = vpack.c.b16 %v1152, %v1098
      %v1423 = vpack.c.b16 %v1153, %v1099
      %v1424 = vpack.c.b16 %v1154, %v1100
      %v1425 = vpack.c.b16 %v1155, %v1101
      %v1426 = vpack.c.b16 %v1156, %v1102
      %v1427 = vpack.c.b16 %v1157, %v1103
      %v1428 = vpack.c.b16 %v1212, %v1158
      %v1429 = vpack.c.b16 %v1213, %v1159
      %v1430 = vpack.c.b16 %v1214, %v1160
      %v1431 = vpack.c.b16 %v1215, %v1161
      %v1432 = vpack.c.b16 %v1216, %v1162
      %v1433 = vpack.c.b16 %v1217, %v1163
      %v1434 = vpack.c.b16 %v1218, %v1164
      %v1435 = vpack.c.b16 %v1219, %v1165
      %v1436 = vpack.c.b16 %v1220, %v1166
      %v1437 = vpack.c.b16 %v1221, %v1167
      %v1438 = vpack.c.b16 %v1222, %v1168
      %v1439 = vpack.c.b16 %v1223, %v1169
      %v1440 = vpack.c.b16 %v1224, %v1170
      %v1441 = vpack.c.b16 %v1225, %v1171
      %v1442 = vpack.c.b16 %v1226, %v1172
      %v1443 = vpack.c.b16 %v1227, %v1173
      %v1444 = vpack.c.b16 %v1228, %v1174
      %v1445 = vpack.c.b16 %v1229, %v1175
      %v1446 = vpack.c.b16 %v1230, %v1176
      %v1447 = vpack.c.b16 %v1231, %v1177
      %v1448 = vpack.c.b16 %v1232, %v1178
      %v1449 = vpack.c.b16 %v1233, %v1179
      %v1450 = vpack.c.b16 %v1234, %v1180
      %v1451 = vpack.c.b16 %v1235, %v1181
      %v1452 = vpack.c.b16 %v1236, %v1182
      %v1453 = vpack.c.b16 %v1237, %v1183
      %v1454 = vpack.c.b16 %v1238, %v1184
      %v1455 = vpack.c.b16 %v1239, %v1185
      %v1456 = vpack.c.b16 %v1240, %v1186
      %v1457 = vpack.c.b16 %v1241, %v1187
      %v1458 = vpack.c.b16 %v1242, %v1188
      %v1459 = vpack.c.b16 %v1243, %v1189
      %v1460 = vpack.c.b16 %v1244, %v1190
      %v1461 = vpack.c.b16 %v1245, %v1191
      %v1462 = vpack.c.b16 %v1246, %v1192
      %v1463 = vpack.c.b16 %v1247, %v1193
      %v1464 = vpack.c.b16 %v1248, %v1194
      %v1465 = vpack.c.b16 %v1249, %v1195
      %v1466 = vpack.c.b16 %v1250, %v1196
      %v1467 = vpack.c.b16 %v1251, %v1197
      %v1468 = vpack.c.b16 %v1252, %v1198
      %v1469 = vpack.c.b16 %v1253, %v1199
      %v1470 = vpack.c.b16 %v1254, %v1200
      %v1471 = vpack.c.b16 %v1255, %v1201
      %v1472 = vpack.c.b16 %v1256, %v1202
      %v1473 = vpack.c.b16 %v1257, %v1203
      %v1474 = vpack.c.b16 %v1258, %v1204
      %v1475 = vpack.c.b16 %v1259, %v1205
      %v1476 = vpack.c.b16 %v1260, %v1206
      %v1477 = vpack.c.b16 %v1261, %v1207
      %v1478 = vpack.c.b16 %v1262, %v1208
      %v1479 = vpack.c.b16 %v1263, %v1209
      %v1480 = vpack.c.b16 %v1264, %v1210
      %v1481 = vpack.c.b16 %v1265, %v1211
      %vm1698 = vcmask 523264
      %v1700 = vsel %vm1698, %v279, 0
      %1702 = vmatpush.bf16.msra.mxu0 0
      %1703 = vmatpush.bf16.msra.mxu0 0
      %1704 = vmatpush.bf16.msra.mxu0 0
      %1705 = vmatpush.bf16.msra.mxu0 0
      %1706 = vmatpush.bf16.msra.mxu0 %v1428
      %1707 = vmatpush.bf16.msra.mxu0 %v1374
      %1708 = vmatpush.bf16.msra.mxu0 %v1320
      %1709 = vmatpush.bf16.msra.mxu0 %v1266
      %1710 = vmatmul.bf16.gmra.mxu0 %v1700
      %v1711 = vpop.f32.mrf.mxu0
      %v1712 = vadd.f32 %v510, %v1711
      %v1713 = vpop.f32.mrf.mxu0
      %1714 = vdwg.mxu0
      %1715 = vmatpush.bf16.msra.mxu0 0
      %1716 = vmatpush.bf16.msra.mxu0 0
      %1717 = vmatpush.bf16.msra.mxu0 0
      %1718 = vmatpush.bf16.msra.mxu0 0
      %1719 = vmatpush.bf16.msra.mxu0 %v1429
      %1720 = vmatpush.bf16.msra.mxu0 %v1375
      %1721 = vmatpush.bf16.msra.mxu0 %v1321
      %1722 = vmatpush.bf16.msra.mxu0 %v1267
      %1723 = vmatmul.bf16.gmra.mxu0 %v1700
      %v1724 = vpop.f32.mrf.mxu0
      %v1725 = vadd.f32 %v511, %v1724
      %v1726 = vpop.f32.mrf.mxu0
      %1727 = vdwg.mxu0
      %1728 = vmatpush.bf16.msra.mxu0 0
      %1729 = vmatpush.bf16.msra.mxu0 0
      %1730 = vmatpush.bf16.msra.mxu0 0
      %1731 = vmatpush.bf16.msra.mxu0 0
      %1732 = vmatpush.bf16.msra.mxu0 %v1430
      %1733 = vmatpush.bf16.msra.mxu0 %v1376
      %1734 = vmatpush.bf16.msra.mxu0 %v1322
      %1735 = vmatpush.bf16.msra.mxu0 %v1268
      %1736 = vmatmul.bf16.gmra.mxu0 %v1700
      %v1737 = vpop.f32.mrf.mxu0
      %v1738 = vadd.f32 %v512, %v1737
      %v1739 = vpop.f32.mrf.mxu0
      %1740 = vdwg.mxu0
      %1741 = vmatpush.bf16.msra.mxu0 0
      %1742 = vmatpush.bf16.msra.mxu0 0
      %1743 = vmatpush.bf16.msra.mxu0 0
      %1744 = vmatpush.bf16.msra.mxu0 0
      %1745 = vmatpush.bf16.msra.mxu0 %v1431
      %1746 = vmatpush.bf16.msra.mxu0 %v1377
      %1747 = vmatpush.bf16.msra.mxu0 %v1323
      %1748 = vmatpush.bf16.msra.mxu0 %v1269
      %1749 = vmatmul.bf16.gmra.mxu0 %v1700
      %v1750 = vpop.f32.mrf.mxu0
      %v1751 = vadd.f32 %v513, %v1750
      %v1752 = vpop.f32.mrf.mxu0
      %1753 = vdwg.mxu0
      %1754 = vmatpush.bf16.msra.mxu0 0
      %1755 = vmatpush.bf16.msra.mxu0 0
      %1756 = vmatpush.bf16.msra.mxu0 0
      %1757 = vmatpush.bf16.msra.mxu0 0
      %1758 = vmatpush.bf16.msra.mxu0 %v1432
      %1759 = vmatpush.bf16.msra.mxu0 %v1378
      %1760 = vmatpush.bf16.msra.mxu0 %v1324
      %1761 = vmatpush.bf16.msra.mxu0 %v1270
      %1762 = vmatmul.bf16.gmra.mxu0 %v1700
      %v1763 = vpop.f32.mrf.mxu0
      %v1764 = vadd.f32 %v514, %v1763
      %v1765 = vpop.f32.mrf.mxu0
      %1766 = vdwg.mxu0
      %1767 = vmatpush.bf16.msra.mxu0 0
      %1768 = vmatpush.bf16.msra.mxu0 0
      %1769 = vmatpush.bf16.msra.mxu0 0
      %1770 = vmatpush.bf16.msra.mxu0 0
      %1771 = vmatpush.bf16.msra.mxu0 %v1433
      %1772 = vmatpush.bf16.msra.mxu0 %v1379
      %1773 = vmatpush.bf16.msra.mxu0 %v1325
      %1774 = vmatpush.bf16.msra.mxu0 %v1271
      %1775 = vmatmul.bf16.gmra.mxu0 %v1700
      %v1776 = vpop.f32.mrf.mxu0
      %v1777 = vadd.f32 %v515, %v1776
      %v1778 = vpop.f32.mrf.mxu0
      %1779 = vdwg.mxu0
      %1780 = vmatpush.bf16.msra.mxu0 0
      %1781 = vmatpush.bf16.msra.mxu0 0
      %1782 = vmatpush.bf16.msra.mxu0 0
      %1783 = vmatpush.bf16.msra.mxu0 0
      %1784 = vmatpush.bf16.msra.mxu0 %v1434
      %1785 = vmatpush.bf16.msra.mxu0 %v1380
      %1786 = vmatpush.bf16.msra.mxu0 %v1326
      %1787 = vmatpush.bf16.msra.mxu0 %v1272
      %1788 = vmatmul.bf16.gmra.mxu0 %v1700
      %v1789 = vpop.f32.mrf.mxu0
      %v1790 = vadd.f32 %v516, %v1789
      %v1791 = vpop.f32.mrf.mxu0
      %1792 = vdwg.mxu0
      %1793 = vmatpush.bf16.msra.mxu0 0
      %1794 = vmatpush.bf16.msra.mxu0 0
      %1795 = vmatpush.bf16.msra.mxu0 0
      %1796 = vmatpush.bf16.msra.mxu0 0
      %1797 = vmatpush.bf16.msra.mxu0 %v1435
      %1798 = vmatpush.bf16.msra.mxu0 %v1381
      %1799 = vmatpush.bf16.msra.mxu0 %v1327
      %1800 = vmatpush.bf16.msra.mxu0 %v1273
      %1801 = vmatmul.bf16.gmra.mxu0 %v1700
      %v1802 = vpop.f32.mrf.mxu0
      %v1803 = vadd.f32 %v517, %v1802
      %v1804 = vpop.f32.mrf.mxu0
      %1805 = vdwg.mxu0
      %1806 = vmatpush.bf16.msra.mxu0 0
      %1807 = vmatpush.bf16.msra.mxu0 0
      %1808 = vmatpush.bf16.msra.mxu0 0
      %1809 = vmatpush.bf16.msra.mxu0 0
      %1810 = vmatpush.bf16.msra.mxu0 %v1436
      %1811 = vmatpush.bf16.msra.mxu0 %v1382
      %1812 = vmatpush.bf16.msra.mxu0 %v1328
      %1813 = vmatpush.bf16.msra.mxu0 %v1274
      %1814 = vmatmul.bf16.gmra.mxu0 %v1700
      %v1815 = vpop.f32.mrf.mxu0
      %v1816 = vadd.f32 %v518, %v1815
      %v1817 = vpop.f32.mrf.mxu0
      %1818 = vdwg.mxu0
      %1819 = vmatpush.bf16.msra.mxu0 0
      %1820 = vmatpush.bf16.msra.mxu0 0
      %1821 = vmatpush.bf16.msra.mxu0 0
      %1822 = vmatpush.bf16.msra.mxu0 0
      %1823 = vmatpush.bf16.msra.mxu0 %v1437
      %1824 = vmatpush.bf16.msra.mxu0 %v1383
      %1825 = vmatpush.bf16.msra.mxu0 %v1329
      %1826 = vmatpush.bf16.msra.mxu0 %v1275
      %1827 = vmatmul.bf16.gmra.mxu0 %v1700
      %v1828 = vpop.f32.mrf.mxu0
      %v1829 = vadd.f32 %v519, %v1828
      %v1830 = vpop.f32.mrf.mxu0
      %1831 = vdwg.mxu0
      %1832 = vmatpush.bf16.msra.mxu0 0
      %1833 = vmatpush.bf16.msra.mxu0 0
      %1834 = vmatpush.bf16.msra.mxu0 0
      %1835 = vmatpush.bf16.msra.mxu0 0
      %1836 = vmatpush.bf16.msra.mxu0 %v1438
      %1837 = vmatpush.bf16.msra.mxu0 %v1384
      %1838 = vmatpush.bf16.msra.mxu0 %v1330
      %1839 = vmatpush.bf16.msra.mxu0 %v1276
      %1840 = vmatmul.bf16.gmra.mxu0 %v1700
      %v1841 = vpop.f32.mrf.mxu0
      %v1842 = vadd.f32 %v520, %v1841
      %v1843 = vpop.f32.mrf.mxu0
      %1844 = vdwg.mxu0
      %1845 = vmatpush.bf16.msra.mxu0 0
      %1846 = vmatpush.bf16.msra.mxu0 0
      %1847 = vmatpush.bf16.msra.mxu0 0
      %1848 = vmatpush.bf16.msra.mxu0 0
      %1849 = vmatpush.bf16.msra.mxu0 %v1439
      %1850 = vmatpush.bf16.msra.mxu0 %v1385
      %1851 = vmatpush.bf16.msra.mxu0 %v1331
      %1852 = vmatpush.bf16.msra.mxu0 %v1277
      %1853 = vmatmul.bf16.gmra.mxu0 %v1700
      %v1854 = vpop.f32.mrf.mxu0
      %v1855 = vadd.f32 %v521, %v1854
      %v1856 = vpop.f32.mrf.mxu0
      %1857 = vdwg.mxu0
      %1858 = vmatpush.bf16.msra.mxu0 0
      %1859 = vmatpush.bf16.msra.mxu0 0
      %1860 = vmatpush.bf16.msra.mxu0 0
      %1861 = vmatpush.bf16.msra.mxu0 0
      %1862 = vmatpush.bf16.msra.mxu0 %v1440
      %1863 = vmatpush.bf16.msra.mxu0 %v1386
      %1864 = vmatpush.bf16.msra.mxu0 %v1332
      %1865 = vmatpush.bf16.msra.mxu0 %v1278
      %1866 = vmatmul.bf16.gmra.mxu0 %v1700
      %v1867 = vpop.f32.mrf.mxu0
      %v1868 = vadd.f32 %v522, %v1867
      %v1869 = vpop.f32.mrf.mxu0
      %1870 = vdwg.mxu0
      %1871 = vmatpush.bf16.msra.mxu0 0
      %1872 = vmatpush.bf16.msra.mxu0 0
      %1873 = vmatpush.bf16.msra.mxu0 0
      %1874 = vmatpush.bf16.msra.mxu0 0
      %1875 = vmatpush.bf16.msra.mxu0 %v1441
      %1876 = vmatpush.bf16.msra.mxu0 %v1387
      %1877 = vmatpush.bf16.msra.mxu0 %v1333
      %1878 = vmatpush.bf16.msra.mxu0 %v1279
      %1879 = vmatmul.bf16.gmra.mxu0 %v1700
      %v1880 = vpop.f32.mrf.mxu0
      %v1881 = vadd.f32 %v523, %v1880
      %v1882 = vpop.f32.mrf.mxu0
      %1883 = vdwg.mxu0
      %1884 = vmatpush.bf16.msra.mxu0 0
      %1885 = vmatpush.bf16.msra.mxu0 0
      %1886 = vmatpush.bf16.msra.mxu0 0
      %1887 = vmatpush.bf16.msra.mxu0 0
      %1888 = vmatpush.bf16.msra.mxu0 %v1442
      %1889 = vmatpush.bf16.msra.mxu0 %v1388
      %1890 = vmatpush.bf16.msra.mxu0 %v1334
      %1891 = vmatpush.bf16.msra.mxu0 %v1280
      %1892 = vmatmul.bf16.gmra.mxu0 %v1700
      %v1893 = vpop.f32.mrf.mxu0
      %v1894 = vadd.f32 %v524, %v1893
      %v1895 = vpop.f32.mrf.mxu0
      %1896 = vdwg.mxu0
      %1897 = vmatpush.bf16.msra.mxu0 0
      %1898 = vmatpush.bf16.msra.mxu0 0
      %1899 = vmatpush.bf16.msra.mxu0 0
      %1900 = vmatpush.bf16.msra.mxu0 0
      %1901 = vmatpush.bf16.msra.mxu0 %v1443
      %1902 = vmatpush.bf16.msra.mxu0 %v1389
      %1903 = vmatpush.bf16.msra.mxu0 %v1335
      %1904 = vmatpush.bf16.msra.mxu0 %v1281
      %1905 = vmatmul.bf16.gmra.mxu0 %v1700
      %v1906 = vpop.f32.mrf.mxu0
      %v1907 = vadd.f32 %v525, %v1906
      %v1908 = vpop.f32.mrf.mxu0
      %1909 = vdwg.mxu0
      %1910 = vmatpush.bf16.msra.mxu0 0
      %1911 = vmatpush.bf16.msra.mxu0 0
      %1912 = vmatpush.bf16.msra.mxu0 0
      %1913 = vmatpush.bf16.msra.mxu0 0
      %1914 = vmatpush.bf16.msra.mxu0 %v1444
      %1915 = vmatpush.bf16.msra.mxu0 %v1390
      %1916 = vmatpush.bf16.msra.mxu0 %v1336
      %1917 = vmatpush.bf16.msra.mxu0 %v1282
      %1918 = vmatmul.bf16.gmra.mxu0 %v1700
      %v1919 = vpop.f32.mrf.mxu0
      %v1920 = vadd.f32 %v526, %v1919
      %v1921 = vpop.f32.mrf.mxu0
      %1922 = vdwg.mxu0
      %1923 = vmatpush.bf16.msra.mxu0 0
      %1924 = vmatpush.bf16.msra.mxu0 0
      %1925 = vmatpush.bf16.msra.mxu0 0
      %1926 = vmatpush.bf16.msra.mxu0 0
      %1927 = vmatpush.bf16.msra.mxu0 %v1445
      %1928 = vmatpush.bf16.msra.mxu0 %v1391
      %1929 = vmatpush.bf16.msra.mxu0 %v1337
      %1930 = vmatpush.bf16.msra.mxu0 %v1283
      %1931 = vmatmul.bf16.gmra.mxu0 %v1700
      %v1932 = vpop.f32.mrf.mxu0
      %v1933 = vadd.f32 %v527, %v1932
      %v1934 = vpop.f32.mrf.mxu0
      %1935 = vdwg.mxu0
      %1936 = vmatpush.bf16.msra.mxu0 0
      %1937 = vmatpush.bf16.msra.mxu0 0
      %1938 = vmatpush.bf16.msra.mxu0 0
      %1939 = vmatpush.bf16.msra.mxu0 0
      %1940 = vmatpush.bf16.msra.mxu0 %v1446
      %1941 = vmatpush.bf16.msra.mxu0 %v1392
      %1942 = vmatpush.bf16.msra.mxu0 %v1338
      %1943 = vmatpush.bf16.msra.mxu0 %v1284
      %1944 = vmatmul.bf16.gmra.mxu0 %v1700
      %v1945 = vpop.f32.mrf.mxu0
      %v1946 = vadd.f32 %v528, %v1945
      %v1947 = vpop.f32.mrf.mxu0
      %1948 = vdwg.mxu0
      %1949 = vmatpush.bf16.msra.mxu0 0
      %1950 = vmatpush.bf16.msra.mxu0 0
      %1951 = vmatpush.bf16.msra.mxu0 0
      %1952 = vmatpush.bf16.msra.mxu0 0
      %1953 = vmatpush.bf16.msra.mxu0 %v1447
      %1954 = vmatpush.bf16.msra.mxu0 %v1393
      %1955 = vmatpush.bf16.msra.mxu0 %v1339
      %1956 = vmatpush.bf16.msra.mxu0 %v1285
      %1957 = vmatmul.bf16.gmra.mxu0 %v1700
      %v1958 = vpop.f32.mrf.mxu0
      %v1959 = vadd.f32 %v529, %v1958
      %v1960 = vpop.f32.mrf.mxu0
      %1961 = vdwg.mxu0
      %1962 = vmatpush.bf16.msra.mxu0 0
      %1963 = vmatpush.bf16.msra.mxu0 0
      %1964 = vmatpush.bf16.msra.mxu0 0
      %1965 = vmatpush.bf16.msra.mxu0 0
      %1966 = vmatpush.bf16.msra.mxu0 %v1448
      %1967 = vmatpush.bf16.msra.mxu0 %v1394
      %1968 = vmatpush.bf16.msra.mxu0 %v1340
      %1969 = vmatpush.bf16.msra.mxu0 %v1286
      %1970 = vmatmul.bf16.gmra.mxu0 %v1700
      %v1971 = vpop.f32.mrf.mxu0
      %v1972 = vadd.f32 %v530, %v1971
      %v1973 = vpop.f32.mrf.mxu0
      %1974 = vdwg.mxu0
      %1975 = vmatpush.bf16.msra.mxu0 0
      %1976 = vmatpush.bf16.msra.mxu0 0
      %1977 = vmatpush.bf16.msra.mxu0 0
      %1978 = vmatpush.bf16.msra.mxu0 0
      %1979 = vmatpush.bf16.msra.mxu0 %v1449
      %1980 = vmatpush.bf16.msra.mxu0 %v1395
      %1981 = vmatpush.bf16.msra.mxu0 %v1341
      %1982 = vmatpush.bf16.msra.mxu0 %v1287
      %1983 = vmatmul.bf16.gmra.mxu0 %v1700
      %v1984 = vpop.f32.mrf.mxu0
      %v1985 = vadd.f32 %v531, %v1984
      %v1986 = vpop.f32.mrf.mxu0
      %1987 = vdwg.mxu0
      %1988 = vmatpush.bf16.msra.mxu0 0
      %1989 = vmatpush.bf16.msra.mxu0 0
      %1990 = vmatpush.bf16.msra.mxu0 0
      %1991 = vmatpush.bf16.msra.mxu0 0
      %1992 = vmatpush.bf16.msra.mxu0 %v1450
      %1993 = vmatpush.bf16.msra.mxu0 %v1396
      %1994 = vmatpush.bf16.msra.mxu0 %v1342
      %1995 = vmatpush.bf16.msra.mxu0 %v1288
      %1996 = vmatmul.bf16.gmra.mxu0 %v1700
      %v1997 = vpop.f32.mrf.mxu0
      %v1998 = vadd.f32 %v532, %v1997
      %v1999 = vpop.f32.mrf.mxu0
      %2000 = vdwg.mxu0
      %2001 = vmatpush.bf16.msra.mxu0 0
      %2002 = vmatpush.bf16.msra.mxu0 0
      %2003 = vmatpush.bf16.msra.mxu0 0
      %2004 = vmatpush.bf16.msra.mxu0 0
      %2005 = vmatpush.bf16.msra.mxu0 %v1451
      %2006 = vmatpush.bf16.msra.mxu0 %v1397
      %2007 = vmatpush.bf16.msra.mxu0 %v1343
      %2008 = vmatpush.bf16.msra.mxu0 %v1289
      %2009 = vmatmul.bf16.gmra.mxu0 %v1700
      %v2010 = vpop.f32.mrf.mxu0
      %v2011 = vadd.f32 %v533, %v2010
      %v2012 = vpop.f32.mrf.mxu0
      %2013 = vdwg.mxu0
      %2014 = vmatpush.bf16.msra.mxu0 0
      %2015 = vmatpush.bf16.msra.mxu0 0
      %2016 = vmatpush.bf16.msra.mxu0 0
      %2017 = vmatpush.bf16.msra.mxu0 0
      %2018 = vmatpush.bf16.msra.mxu0 %v1452
      %2019 = vmatpush.bf16.msra.mxu0 %v1398
      %2020 = vmatpush.bf16.msra.mxu0 %v1344
      %2021 = vmatpush.bf16.msra.mxu0 %v1290
      %2022 = vmatmul.bf16.gmra.mxu0 %v1700
      %v2023 = vpop.f32.mrf.mxu0
      %v2024 = vadd.f32 %v534, %v2023
      %v2025 = vpop.f32.mrf.mxu0
      %2026 = vdwg.mxu0
      %2027 = vmatpush.bf16.msra.mxu0 0
      %2028 = vmatpush.bf16.msra.mxu0 0
      %2029 = vmatpush.bf16.msra.mxu0 0
      %2030 = vmatpush.bf16.msra.mxu0 0
      %2031 = vmatpush.bf16.msra.mxu0 %v1453
      %2032 = vmatpush.bf16.msra.mxu0 %v1399
      %2033 = vmatpush.bf16.msra.mxu0 %v1345
      %2034 = vmatpush.bf16.msra.mxu0 %v1291
      %2035 = vmatmul.bf16.gmra.mxu0 %v1700
      %v2036 = vpop.f32.mrf.mxu0
      %v2037 = vadd.f32 %v535, %v2036
      %v2038 = vpop.f32.mrf.mxu0
      %2039 = vdwg.mxu0
      %2040 = vmatpush.bf16.msra.mxu0 0
      %2041 = vmatpush.bf16.msra.mxu0 0
      %2042 = vmatpush.bf16.msra.mxu0 0
      %2043 = vmatpush.bf16.msra.mxu0 0
      %2044 = vmatpush.bf16.msra.mxu0 %v1454
      %2045 = vmatpush.bf16.msra.mxu0 %v1400
      %2046 = vmatpush.bf16.msra.mxu0 %v1346
      %2047 = vmatpush.bf16.msra.mxu0 %v1292
      %2048 = vmatmul.bf16.gmra.mxu0 %v1700
      %v2049 = vpop.f32.mrf.mxu0
      %v2050 = vadd.f32 %v536, %v2049
      %v2051 = vpop.f32.mrf.mxu0
      %2052 = vdwg.mxu0
      %2053 = vmatpush.bf16.msra.mxu0 0
      %2054 = vmatpush.bf16.msra.mxu0 0
      %2055 = vmatpush.bf16.msra.mxu0 0
      %2056 = vmatpush.bf16.msra.mxu0 0
      %2057 = vmatpush.bf16.msra.mxu0 %v1455
      %2058 = vmatpush.bf16.msra.mxu0 %v1401
      %2059 = vmatpush.bf16.msra.mxu0 %v1347
      %2060 = vmatpush.bf16.msra.mxu0 %v1293
      %2061 = vmatmul.bf16.gmra.mxu0 %v1700
      %v2062 = vpop.f32.mrf.mxu0
      %v2063 = vadd.f32 %v537, %v2062
      %v2064 = vpop.f32.mrf.mxu0
      %2065 = vdwg.mxu0
      %2066 = vmatpush.bf16.msra.mxu0 0
      %2067 = vmatpush.bf16.msra.mxu0 0
      %2068 = vmatpush.bf16.msra.mxu0 0
      %2069 = vmatpush.bf16.msra.mxu0 0
      %2070 = vmatpush.bf16.msra.mxu0 %v1456
      %2071 = vmatpush.bf16.msra.mxu0 %v1402
      %2072 = vmatpush.bf16.msra.mxu0 %v1348
      %2073 = vmatpush.bf16.msra.mxu0 %v1294
      %2074 = vmatmul.bf16.gmra.mxu0 %v1700
      %v2075 = vpop.f32.mrf.mxu0
      %v2076 = vadd.f32 %v538, %v2075
      %v2077 = vpop.f32.mrf.mxu0
      %2078 = vdwg.mxu0
      %2079 = vmatpush.bf16.msra.mxu0 0
      %2080 = vmatpush.bf16.msra.mxu0 0
      %2081 = vmatpush.bf16.msra.mxu0 0
      %2082 = vmatpush.bf16.msra.mxu0 0
      %2083 = vmatpush.bf16.msra.mxu0 %v1457
      %2084 = vmatpush.bf16.msra.mxu0 %v1403
      %2085 = vmatpush.bf16.msra.mxu0 %v1349
      %2086 = vmatpush.bf16.msra.mxu0 %v1295
      %2087 = vmatmul.bf16.gmra.mxu0 %v1700
      %v2088 = vpop.f32.mrf.mxu0
      %v2089 = vadd.f32 %v539, %v2088
      %v2090 = vpop.f32.mrf.mxu0
      %2091 = vdwg.mxu0
      %2092 = vmatpush.bf16.msra.mxu0 0
      %2093 = vmatpush.bf16.msra.mxu0 0
      %2094 = vmatpush.bf16.msra.mxu0 0
      %2095 = vmatpush.bf16.msra.mxu0 0
      %2096 = vmatpush.bf16.msra.mxu0 %v1458
      %2097 = vmatpush.bf16.msra.mxu0 %v1404
      %2098 = vmatpush.bf16.msra.mxu0 %v1350
      %2099 = vmatpush.bf16.msra.mxu0 %v1296
      %2100 = vmatmul.bf16.gmra.mxu0 %v1700
      %v2101 = vpop.f32.mrf.mxu0
      %v2102 = vadd.f32 %v540, %v2101
      %v2103 = vpop.f32.mrf.mxu0
      %2104 = vdwg.mxu0
      %2105 = vmatpush.bf16.msra.mxu0 0
      %2106 = vmatpush.bf16.msra.mxu0 0
      %2107 = vmatpush.bf16.msra.mxu0 0
      %2108 = vmatpush.bf16.msra.mxu0 0
      %2109 = vmatpush.bf16.msra.mxu0 %v1459
      %2110 = vmatpush.bf16.msra.mxu0 %v1405
      %2111 = vmatpush.bf16.msra.mxu0 %v1351
      %2112 = vmatpush.bf16.msra.mxu0 %v1297
      %2113 = vmatmul.bf16.gmra.mxu0 %v1700
      %v2114 = vpop.f32.mrf.mxu0
      %v2115 = vadd.f32 %v541, %v2114
      %v2116 = vpop.f32.mrf.mxu0
      %2117 = vdwg.mxu0
      %2118 = vmatpush.bf16.msra.mxu0 0
      %2119 = vmatpush.bf16.msra.mxu0 0
      %2120 = vmatpush.bf16.msra.mxu0 0
      %2121 = vmatpush.bf16.msra.mxu0 0
      %2122 = vmatpush.bf16.msra.mxu0 %v1460
      %2123 = vmatpush.bf16.msra.mxu0 %v1406
      %2124 = vmatpush.bf16.msra.mxu0 %v1352
      %2125 = vmatpush.bf16.msra.mxu0 %v1298
      %2126 = vmatmul.bf16.gmra.mxu0 %v1700
      %v2127 = vpop.f32.mrf.mxu0
      %v2128 = vadd.f32 %v542, %v2127
      %v2129 = vpop.f32.mrf.mxu0
      %2130 = vdwg.mxu0
      %2131 = vmatpush.bf16.msra.mxu0 0
      %2132 = vmatpush.bf16.msra.mxu0 0
      %2133 = vmatpush.bf16.msra.mxu0 0
      %2134 = vmatpush.bf16.msra.mxu0 0
      %2135 = vmatpush.bf16.msra.mxu0 %v1461
      %2136 = vmatpush.bf16.msra.mxu0 %v1407
      %2137 = vmatpush.bf16.msra.mxu0 %v1353
      %2138 = vmatpush.bf16.msra.mxu0 %v1299
      %2139 = vmatmul.bf16.gmra.mxu0 %v1700
      %v2140 = vpop.f32.mrf.mxu0
      %v2141 = vadd.f32 %v543, %v2140
      %v2142 = vpop.f32.mrf.mxu0
      %2143 = vdwg.mxu0
      %2144 = vmatpush.bf16.msra.mxu0 0
      %2145 = vmatpush.bf16.msra.mxu0 0
      %2146 = vmatpush.bf16.msra.mxu0 0
      %2147 = vmatpush.bf16.msra.mxu0 0
      %2148 = vmatpush.bf16.msra.mxu0 %v1462
      %2149 = vmatpush.bf16.msra.mxu0 %v1408
      %2150 = vmatpush.bf16.msra.mxu0 %v1354
      %2151 = vmatpush.bf16.msra.mxu0 %v1300
      %2152 = vmatmul.bf16.gmra.mxu0 %v1700
      %v2153 = vpop.f32.mrf.mxu0
      %v2154 = vadd.f32 %v544, %v2153
      %v2155 = vpop.f32.mrf.mxu0
      %2156 = vdwg.mxu0
      %2157 = vmatpush.bf16.msra.mxu0 0
      %2158 = vmatpush.bf16.msra.mxu0 0
      %2159 = vmatpush.bf16.msra.mxu0 0
      %2160 = vmatpush.bf16.msra.mxu0 0
      %2161 = vmatpush.bf16.msra.mxu0 %v1463
      %2162 = vmatpush.bf16.msra.mxu0 %v1409
      %2163 = vmatpush.bf16.msra.mxu0 %v1355
      %2164 = vmatpush.bf16.msra.mxu0 %v1301
      %2165 = vmatmul.bf16.gmra.mxu0 %v1700
      %v2166 = vpop.f32.mrf.mxu0
      %v2167 = vadd.f32 %v545, %v2166
      %v2168 = vpop.f32.mrf.mxu0
      %2169 = vdwg.mxu0
      %2170 = vmatpush.bf16.msra.mxu0 0
      %2171 = vmatpush.bf16.msra.mxu0 0
      %2172 = vmatpush.bf16.msra.mxu0 0
      %2173 = vmatpush.bf16.msra.mxu0 0
      %2174 = vmatpush.bf16.msra.mxu0 %v1464
      %2175 = vmatpush.bf16.msra.mxu0 %v1410
      %2176 = vmatpush.bf16.msra.mxu0 %v1356
      %2177 = vmatpush.bf16.msra.mxu0 %v1302
      %2178 = vmatmul.bf16.gmra.mxu0 %v1700
      %v2179 = vpop.f32.mrf.mxu0
      %v2180 = vadd.f32 %v546, %v2179
      %v2181 = vpop.f32.mrf.mxu0
      %2182 = vdwg.mxu0
      %2183 = vmatpush.bf16.msra.mxu0 0
      %2184 = vmatpush.bf16.msra.mxu0 0
      %2185 = vmatpush.bf16.msra.mxu0 0
      %2186 = vmatpush.bf16.msra.mxu0 0
      %2187 = vmatpush.bf16.msra.mxu0 %v1465
      %2188 = vmatpush.bf16.msra.mxu0 %v1411
      %2189 = vmatpush.bf16.msra.mxu0 %v1357
      %2190 = vmatpush.bf16.msra.mxu0 %v1303
      %2191 = vmatmul.bf16.gmra.mxu0 %v1700
      %v2192 = vpop.f32.mrf.mxu0
      %v2193 = vadd.f32 %v547, %v2192
      %v2194 = vpop.f32.mrf.mxu0
      %2195 = vdwg.mxu0
      %2196 = vmatpush.bf16.msra.mxu0 0
      %2197 = vmatpush.bf16.msra.mxu0 0
      %2198 = vmatpush.bf16.msra.mxu0 0
      %2199 = vmatpush.bf16.msra.mxu0 0
      %2200 = vmatpush.bf16.msra.mxu0 %v1466
      %2201 = vmatpush.bf16.msra.mxu0 %v1412
      %2202 = vmatpush.bf16.msra.mxu0 %v1358
      %2203 = vmatpush.bf16.msra.mxu0 %v1304
      %2204 = vmatmul.bf16.gmra.mxu0 %v1700
      %v2205 = vpop.f32.mrf.mxu0
      %v2206 = vadd.f32 %v548, %v2205
      %v2207 = vpop.f32.mrf.mxu0
      %2208 = vdwg.mxu0
      %2209 = vmatpush.bf16.msra.mxu0 0
      %2210 = vmatpush.bf16.msra.mxu0 0
      %2211 = vmatpush.bf16.msra.mxu0 0
      %2212 = vmatpush.bf16.msra.mxu0 0
      %2213 = vmatpush.bf16.msra.mxu0 %v1467
      %2214 = vmatpush.bf16.msra.mxu0 %v1413
      %2215 = vmatpush.bf16.msra.mxu0 %v1359
      %2216 = vmatpush.bf16.msra.mxu0 %v1305
      %2217 = vmatmul.bf16.gmra.mxu0 %v1700
      %v2218 = vpop.f32.mrf.mxu0
      %v2219 = vadd.f32 %v549, %v2218
      %v2220 = vpop.f32.mrf.mxu0
      %2221 = vdwg.mxu0
      %2222 = vmatpush.bf16.msra.mxu0 0
      %2223 = vmatpush.bf16.msra.mxu0 0
      %2224 = vmatpush.bf16.msra.mxu0 0
      %2225 = vmatpush.bf16.msra.mxu0 0
      %2226 = vmatpush.bf16.msra.mxu0 %v1468
      %2227 = vmatpush.bf16.msra.mxu0 %v1414
      %2228 = vmatpush.bf16.msra.mxu0 %v1360
      %2229 = vmatpush.bf16.msra.mxu0 %v1306
      %2230 = vmatmul.bf16.gmra.mxu0 %v1700
      %v2231 = vpop.f32.mrf.mxu0
      %v2232 = vadd.f32 %v550, %v2231
      %v2233 = vpop.f32.mrf.mxu0
      %2234 = vdwg.mxu0
      %2235 = vmatpush.bf16.msra.mxu0 0
      %2236 = vmatpush.bf16.msra.mxu0 0
      %2237 = vmatpush.bf16.msra.mxu0 0
      %2238 = vmatpush.bf16.msra.mxu0 0
      %2239 = vmatpush.bf16.msra.mxu0 %v1469
      %2240 = vmatpush.bf16.msra.mxu0 %v1415
      %2241 = vmatpush.bf16.msra.mxu0 %v1361
      %2242 = vmatpush.bf16.msra.mxu0 %v1307
      %2243 = vmatmul.bf16.gmra.mxu0 %v1700
      %v2244 = vpop.f32.mrf.mxu0
      %v2245 = vadd.f32 %v551, %v2244
      %v2246 = vpop.f32.mrf.mxu0
      %2247 = vdwg.mxu0
      %2248 = vmatpush.bf16.msra.mxu0 0
      %2249 = vmatpush.bf16.msra.mxu0 0
      %2250 = vmatpush.bf16.msra.mxu0 0
      %2251 = vmatpush.bf16.msra.mxu0 0
      %2252 = vmatpush.bf16.msra.mxu0 %v1470
      %2253 = vmatpush.bf16.msra.mxu0 %v1416
      %2254 = vmatpush.bf16.msra.mxu0 %v1362
      %2255 = vmatpush.bf16.msra.mxu0 %v1308
      %2256 = vmatmul.bf16.gmra.mxu0 %v1700
      %v2257 = vpop.f32.mrf.mxu0
      %v2258 = vadd.f32 %v552, %v2257
      %v2259 = vpop.f32.mrf.mxu0
      %2260 = vdwg.mxu0
      %2261 = vmatpush.bf16.msra.mxu0 0
      %2262 = vmatpush.bf16.msra.mxu0 0
      %2263 = vmatpush.bf16.msra.mxu0 0
      %2264 = vmatpush.bf16.msra.mxu0 0
      %2265 = vmatpush.bf16.msra.mxu0 %v1471
      %2266 = vmatpush.bf16.msra.mxu0 %v1417
      %2267 = vmatpush.bf16.msra.mxu0 %v1363
      %2268 = vmatpush.bf16.msra.mxu0 %v1309
      %2269 = vmatmul.bf16.gmra.mxu0 %v1700
      %v2270 = vpop.f32.mrf.mxu0
      %v2271 = vadd.f32 %v553, %v2270
      %v2272 = vpop.f32.mrf.mxu0
      %2273 = vdwg.mxu0
      %2274 = vmatpush.bf16.msra.mxu0 0
      %2275 = vmatpush.bf16.msra.mxu0 0
      %2276 = vmatpush.bf16.msra.mxu0 0
      %2277 = vmatpush.bf16.msra.mxu0 0
      %2278 = vmatpush.bf16.msra.mxu0 %v1472
      %2279 = vmatpush.bf16.msra.mxu0 %v1418
      %2280 = vmatpush.bf16.msra.mxu0 %v1364
      %2281 = vmatpush.bf16.msra.mxu0 %v1310
      %2282 = vmatmul.bf16.gmra.mxu0 %v1700
      %v2283 = vpop.f32.mrf.mxu0
      %v2284 = vadd.f32 %v554, %v2283
      %v2285 = vpop.f32.mrf.mxu0
      %2286 = vdwg.mxu0
      %2287 = vmatpush.bf16.msra.mxu0 0
      %2288 = vmatpush.bf16.msra.mxu0 0
      %2289 = vmatpush.bf16.msra.mxu0 0
      %2290 = vmatpush.bf16.msra.mxu0 0
      %2291 = vmatpush.bf16.msra.mxu0 %v1473
      %2292 = vmatpush.bf16.msra.mxu0 %v1419
      %2293 = vmatpush.bf16.msra.mxu0 %v1365
      %2294 = vmatpush.bf16.msra.mxu0 %v1311
      %2295 = vmatmul.bf16.gmra.mxu0 %v1700
      %v2296 = vpop.f32.mrf.mxu0
      %v2297 = vadd.f32 %v555, %v2296
      %v2298 = vpop.f32.mrf.mxu0
      %2299 = vdwg.mxu0
      %2300 = vmatpush.bf16.msra.mxu0 0
      %2301 = vmatpush.bf16.msra.mxu0 0
      %2302 = vmatpush.bf16.msra.mxu0 0
      %2303 = vmatpush.bf16.msra.mxu0 0
      %2304 = vmatpush.bf16.msra.mxu0 %v1474
      %2305 = vmatpush.bf16.msra.mxu0 %v1420
      %2306 = vmatpush.bf16.msra.mxu0 %v1366
      %2307 = vmatpush.bf16.msra.mxu0 %v1312
      %2308 = vmatmul.bf16.gmra.mxu0 %v1700
      %v2309 = vpop.f32.mrf.mxu0
      %v2310 = vadd.f32 %v556, %v2309
      %v2311 = vpop.f32.mrf.mxu0
      %2312 = vdwg.mxu0
      %2313 = vmatpush.bf16.msra.mxu0 0
      %2314 = vmatpush.bf16.msra.mxu0 0
      %2315 = vmatpush.bf16.msra.mxu0 0
      %2316 = vmatpush.bf16.msra.mxu0 0
      %2317 = vmatpush.bf16.msra.mxu0 %v1475
      %2318 = vmatpush.bf16.msra.mxu0 %v1421
      %2319 = vmatpush.bf16.msra.mxu0 %v1367
      %2320 = vmatpush.bf16.msra.mxu0 %v1313
      %2321 = vmatmul.bf16.gmra.mxu0 %v1700
      %v2322 = vpop.f32.mrf.mxu0
      %v2323 = vadd.f32 %v557, %v2322
      %v2324 = vpop.f32.mrf.mxu0
      %2325 = vdwg.mxu0
      %2326 = vmatpush.bf16.msra.mxu0 0
      %2327 = vmatpush.bf16.msra.mxu0 0
      %2328 = vmatpush.bf16.msra.mxu0 0
      %2329 = vmatpush.bf16.msra.mxu0 0
      %2330 = vmatpush.bf16.msra.mxu0 %v1476
      %2331 = vmatpush.bf16.msra.mxu0 %v1422
      %2332 = vmatpush.bf16.msra.mxu0 %v1368
      %2333 = vmatpush.bf16.msra.mxu0 %v1314
      %2334 = vmatmul.bf16.gmra.mxu0 %v1700
      %v2335 = vpop.f32.mrf.mxu0
      %v2336 = vadd.f32 %v558, %v2335
      %v2337 = vpop.f32.mrf.mxu0
      %2338 = vdwg.mxu0
      %2339 = vmatpush.bf16.msra.mxu0 0
      %2340 = vmatpush.bf16.msra.mxu0 0
      %2341 = vmatpush.bf16.msra.mxu0 0
      %2342 = vmatpush.bf16.msra.mxu0 0
      %2343 = vmatpush.bf16.msra.mxu0 %v1477
      %2344 = vmatpush.bf16.msra.mxu0 %v1423
      %2345 = vmatpush.bf16.msra.mxu0 %v1369
      %2346 = vmatpush.bf16.msra.mxu0 %v1315
      %2347 = vmatmul.bf16.gmra.mxu0 %v1700
      %v2348 = vpop.f32.mrf.mxu0
      %v2349 = vadd.f32 %v559, %v2348
      %v2350 = vpop.f32.mrf.mxu0
      %2351 = vdwg.mxu0
      %2352 = vmatpush.bf16.msra.mxu0 0
      %2353 = vmatpush.bf16.msra.mxu0 0
      %2354 = vmatpush.bf16.msra.mxu0 0
      %2355 = vmatpush.bf16.msra.mxu0 0
      %2356 = vmatpush.bf16.msra.mxu0 %v1478
      %2357 = vmatpush.bf16.msra.mxu0 %v1424
      %2358 = vmatpush.bf16.msra.mxu0 %v1370
      %2359 = vmatpush.bf16.msra.mxu0 %v1316
      %2360 = vmatmul.bf16.gmra.mxu0 %v1700
      %v2361 = vpop.f32.mrf.mxu0
      %v2362 = vadd.f32 %v560, %v2361
      %v2363 = vpop.f32.mrf.mxu0
      %2364 = vdwg.mxu0
      %2365 = vmatpush.bf16.msra.mxu0 0
      %2366 = vmatpush.bf16.msra.mxu0 0
      %2367 = vmatpush.bf16.msra.mxu0 0
      %2368 = vmatpush.bf16.msra.mxu0 0
      %2369 = vmatpush.bf16.msra.mxu0 %v1479
      %2370 = vmatpush.bf16.msra.mxu0 %v1425
      %2371 = vmatpush.bf16.msra.mxu0 %v1371
      %2372 = vmatpush.bf16.msra.mxu0 %v1317
      %2373 = vmatmul.bf16.gmra.mxu0 %v1700
      %v2374 = vpop.f32.mrf.mxu0
      %v2375 = vadd.f32 %v561, %v2374
      %v2376 = vpop.f32.mrf.mxu0
      %2377 = vdwg.mxu0
      %2378 = vmatpush.bf16.msra.mxu0 0
      %2379 = vmatpush.bf16.msra.mxu0 0
      %2380 = vmatpush.bf16.msra.mxu0 0
      %2381 = vmatpush.bf16.msra.mxu0 0
      %2382 = vmatpush.bf16.msra.mxu0 %v1480
      %2383 = vmatpush.bf16.msra.mxu0 %v1426
      %2384 = vmatpush.bf16.msra.mxu0 %v1372
      %2385 = vmatpush.bf16.msra.mxu0 %v1318
      %2386 = vmatmul.bf16.gmra.mxu0 %v1700
      %v2387 = vpop.f32.mrf.mxu0
      %v2388 = vadd.f32 %v562, %v2387
      %v2389 = vpop.f32.mrf.mxu0
      %2390 = vdwg.mxu0
      %2391 = vmatpush.bf16.msra.mxu0 0
      %2392 = vmatpush.bf16.msra.mxu0 0
      %2393 = vmatpush.bf16.msra.mxu0 0
      %2394 = vmatpush.bf16.msra.mxu0 0
      %2395 = vmatpush.bf16.msra.mxu0 %v1481
      %2396 = vmatpush.bf16.msra.mxu0 %v1427
      %2397 = vmatpush.bf16.msra.mxu0 %v1373
      %2398 = vmatpush.bf16.msra.mxu0 %v1319
      %2399 = vmatmul.bf16.gmra.mxu0 %v1700
      %v2400 = vpop.f32.mrf.mxu0
      %v2401 = vadd.f32 %v563, %v2400
      %v2402 = vpop.f32.mrf.mxu0
      %2403 = vdwg.mxu0
      %2404 = vst [vmem:[%s272] sm:$0xff] %v1712
      %2405 = vst [vmem:[%s272 + $0x8] sm:$0xff] %v1725
      %2406 = vst [vmem:[%s272 + $0x10] sm:$0xff] %v1738
      %2407 = vst [vmem:[%s272 + $0x18] sm:$0xff] %v1751
      %2408 = vst [vmem:[%s272 + $0x20] sm:$0xff] %v1764
      %2409 = vst [vmem:[%s272 + $0x28] sm:$0xff] %v1777
      %2410 = vst [vmem:[%s272 + $0x30] sm:$0xff] %v1790
      %2411 = vst [vmem:[%s272 + $0x38] sm:$0xff] %v1803
      %2412 = vst [vmem:[%s272 + $0x40] sm:$0xff] %v1816
      %2413 = vst [vmem:[%s272 + $0x48] sm:$0xff] %v1829
      %2414 = vst [vmem:[%s272 + $0x50] sm:$0xff] %v1842
      %2415 = vst [vmem:[%s272 + $0x58] sm:$0xff] %v1855
      %2416 = vst [vmem:[%s272 + $0x60] sm:$0xff] %v1868
      %2417 = vst [vmem:[%s272 + $0x68] sm:$0xff] %v1881
      %2418 = vst [vmem:[%s272 + $0x70] sm:$0xff] %v1894
      %2419 = vst [vmem:[%s272 + $0x78] sm:$0xff] %v1907
      %2420 = vst [vmem:[%s272 + $0x80] sm:$0xff] %v1920
      %2421 = vst [vmem:[%s272 + $0x88] sm:$0xff] %v1933
      %2422 = vst [vmem:[%s272 + $0x90] sm:$0xff] %v1946
      %2423 = vst [vmem:[%s272 + $0x98] sm:$0xff] %v1959
      %2424 = vst [vmem:[%s272 + $0xa0] sm:$0xff] %v1972
      %2425 = vst [vmem:[%s272 + $0xa8] sm:$0xff] %v1985
      %2426 = vst [vmem:[%s272 + $0xb0] sm:$0xff] %v1998
      %2427 = vst [vmem:[%s272 + $0xb8] sm:$0xff] %v2011
      %2428 = vst [vmem:[%s272 + $0xc0] sm:$0xff] %v2024
      %2429 = vst [vmem:[%s272 + $0xc8] sm:$0xff] %v2037
      %2430 = vst [vmem:[%s272 + $0xd0] sm:$0xff] %v2050
      %2431 = vst [vmem:[%s272 + $0xd8] sm:$0xff] %v2063
      %2432 = vst [vmem:[%s272 + $0xe0] sm:$0xff] %v2076
      %2433 = vst [vmem:[%s272 + $0xe8] sm:$0xff] %v2089
      %2434 = vst [vmem:[%s272 + $0xf0] sm:$0xff] %v2102
      %2435 = vst [vmem:[%s272 + $0xf8] sm:$0xff] %v2115
      %2436 = vst [vmem:[%s272 + $0x100] sm:$0xff] %v2128
      %2437 = vst [vmem:[%s272 + $0x108] sm:$0xff] %v2141
      %2438 = vst [vmem:[%s272 + $0x110] sm:$0xff] %v2154
      %2439 = vst [vmem:[%s272 + $0x118] sm:$0xff] %v2167
      %2440 = vst [vmem:[%s272 + $0x120] sm:$0xff] %v2180
      %2441 = vst [vmem:[%s272 + $0x128] sm:$0xff] %v2193
      %2442 = vst [vmem:[%s272 + $0x130] sm:$0xff] %v2206
      %2443 = vst [vmem:[%s272 + $0x138] sm:$0xff] %v2219
      %2444 = vst [vmem:[%s272 + $0x140] sm:$0xff] %v2232
      %2445 = vst [vmem:[%s272 + $0x148] sm:$0xff] %v2245
      %2446 = vst [vmem:[%s272 + $0x150] sm:$0xff] %v2258
      %2447 = vst [vmem:[%s272 + $0x158] sm:$0xff] %v2271
      %2448 = vst [vmem:[%s272 + $0x160] sm:$0xff] %v2284
      %2449 = vst [vmem:[%s272 + $0x168] sm:$0xff] %v2297
      %2450 = vst [vmem:[%s272 + $0x170] sm:$0xff] %v2310
      %2451 = vst [vmem:[%s272 + $0x178] sm:$0xff] %v2323
      %2452 = vst [vmem:[%s272 + $0x180] sm:$0xff] %v2336
      %2453 = vst [vmem:[%s272 + $0x188] sm:$0xff] %v2349
      %2454 = vst [vmem:[%s272 + $0x190] sm:$0xff] %v2362
      %2455 = vst [vmem:[%s272 + $0x198] sm:$0xff] %v2375
      %2456 = vst [vmem:[%s272 + $0x1a0] sm:$0xff] %v2388
      %2457 = vst [vmem:[%s272 + $0x1a8] sm:$0xff] %v2401
      %v2458 = vld [vmem:[%s256] sm:$0xff]
      %v2459 = vld [vmem:[%s256 + $0x8] sm:$0xff]
      %v2460 = vld [vmem:[%s256 + $0x10] sm:$0xff]
      %v2461 = vld [vmem:[%s256 + $0x18] sm:$0xff]
      %v2462 = vld [vmem:[%s256 + $0x20] sm:$0xff]
      %v2463 = vld [vmem:[%s256 + $0x28] sm:$0xff]
      %v2464 = vld [vmem:[%s256 + $0x30] sm:$0xff]
      %v2465 = vld [vmem:[%s256 + $0x38] sm:$0xff]
      %v2466 = vld [vmem:[%s256 + $0x40] sm:$0xff]
      %v2467 = vld [vmem:[%s256 + $0x48] sm:$0xff]
      %v2468 = vld [vmem:[%s256 + $0x50] sm:$0xff]
      %v2469 = vld [vmem:[%s256 + $0x58] sm:$0xff]
      %v2470 = vld [vmem:[%s256 + $0x60] sm:$0xff]
      %v2471 = vld [vmem:[%s256 + $0x68] sm:$0xff]
      %v2472 = vld [vmem:[%s256 + $0x70] sm:$0xff]
      %v2473 = vld [vmem:[%s256 + $0x78] sm:$0xff]
      %v2474 = vld [vmem:[%s256 + $0x80] sm:$0xff]
      %v2475 = vld [vmem:[%s256 + $0x88] sm:$0xff]
      %v2476 = vld [vmem:[%s256 + $0x90] sm:$0xff]
      %v2477 = vld [vmem:[%s256 + $0x98] sm:$0xff]
      %v2478 = vld [vmem:[%s256 + $0xa0] sm:$0xff]
      %v2479 = vld [vmem:[%s256 + $0xa8] sm:$0xff]
      %v2480 = vld [vmem:[%s256 + $0xb0] sm:$0xff]
      %v2481 = vld [vmem:[%s256 + $0xb8] sm:$0xff]
      %v2482 = vld [vmem:[%s256 + $0xc0] sm:$0xff]
      %v2483 = vld [vmem:[%s256 + $0xc8] sm:$0xff]
      %v2484 = vld [vmem:[%s256 + $0xd0] sm:$0xff]
      %v2485 = vld [vmem:[%s256 + $0xd8] sm:$0xff]
      %v2486 = vld [vmem:[%s256 + $0xe0] sm:$0xff]
      %v2487 = vld [vmem:[%s256 + $0xe8] sm:$0xff]
      %v2488 = vld [vmem:[%s256 + $0xf0] sm:$0xff]
      %v2489 = vld [vmem:[%s256 + $0xf8] sm:$0xff]
      %v2490 = vld [vmem:[%s256 + $0x100] sm:$0xff]
      %v2491 = vld [vmem:[%s256 + $0x108] sm:$0xff]
      %v2492 = vld [vmem:[%s256 + $0x110] sm:$0xff]
      %v2493 = vld [vmem:[%s256 + $0x118] sm:$0xff]
      %v2494 = vld [vmem:[%s256 + $0x120] sm:$0xff]
      %v2495 = vld [vmem:[%s256 + $0x128] sm:$0xff]
      %v2496 = vld [vmem:[%s256 + $0x130] sm:$0xff]
      %v2497 = vld [vmem:[%s256 + $0x138] sm:$0xff]
      %v2498 = vld [vmem:[%s256 + $0x140] sm:$0xff]
      %v2499 = vld [vmem:[%s256 + $0x148] sm:$0xff]
      %v2500 = vld [vmem:[%s256 + $0x150] sm:$0xff]
      %v2501 = vld [vmem:[%s256 + $0x158] sm:$0xff]
      %v2502 = vld [vmem:[%s256 + $0x160] sm:$0xff]
      %v2503 = vld [vmem:[%s256 + $0x168] sm:$0xff]
      %v2504 = vld [vmem:[%s256 + $0x170] sm:$0xff]
      %v2505 = vld [vmem:[%s256 + $0x178] sm:$0xff]
      %v2506 = vld [vmem:[%s256 + $0x180] sm:$0xff]
      %v2507 = vld [vmem:[%s256 + $0x188] sm:$0xff]
      %v2508 = vld [vmem:[%s256 + $0x190] sm:$0xff]
      %v2509 = vld [vmem:[%s256 + $0x198] sm:$0xff]
      %v2510 = vld [vmem:[%s256 + $0x1a0] sm:$0xff]
      %v2511 = vld [vmem:[%s256 + $0x1a8] sm:$0xff]
      %v2512 = vsub.f32 %v1712, %v2458
      %v2513 = vsub.f32 %v1725, %v2459
      %v2514 = vsub.f32 %v1738, %v2460
      %v2515 = vsub.f32 %v1751, %v2461
      %v2516 = vsub.f32 %v1764, %v2462
      %v2517 = vsub.f32 %v1777, %v2463
      %v2518 = vsub.f32 %v1790, %v2464
      %v2519 = vsub.f32 %v1803, %v2465
      %v2520 = vsub.f32 %v1816, %v2466
      %v2521 = vsub.f32 %v1829, %v2467
      %v2522 = vsub.f32 %v1842, %v2468
      %v2523 = vsub.f32 %v1855, %v2469
      %v2524 = vsub.f32 %v1868, %v2470
      %v2525 = vsub.f32 %v1881, %v2471
      %v2526 = vsub.f32 %v1894, %v2472
      %v2527 = vsub.f32 %v1907, %v2473
      %v2528 = vsub.f32 %v1920, %v2474
      %v2529 = vsub.f32 %v1933, %v2475
      %v2530 = vsub.f32 %v1946, %v2476
      %v2531 = vsub.f32 %v1959, %v2477
      %v2532 = vsub.f32 %v1972, %v2478
      %v2533 = vsub.f32 %v1985, %v2479
      %v2534 = vsub.f32 %v1998, %v2480
      %v2535 = vsub.f32 %v2011, %v2481
      %v2536 = vsub.f32 %v2024, %v2482
      %v2537 = vsub.f32 %v2037, %v2483
      %v2538 = vsub.f32 %v2050, %v2484
      %v2539 = vsub.f32 %v2063, %v2485
      %v2540 = vsub.f32 %v2076, %v2486
      %v2541 = vsub.f32 %v2089, %v2487
      %v2542 = vsub.f32 %v2102, %v2488
      %v2543 = vsub.f32 %v2115, %v2489
      %v2544 = vsub.f32 %v2128, %v2490
      %v2545 = vsub.f32 %v2141, %v2491
      %v2546 = vsub.f32 %v2154, %v2492
      %v2547 = vsub.f32 %v2167, %v2493
      %v2548 = vsub.f32 %v2180, %v2494
      %v2549 = vsub.f32 %v2193, %v2495
      %v2550 = vsub.f32 %v2206, %v2496
      %v2551 = vsub.f32 %v2219, %v2497
      %v2552 = vsub.f32 %v2232, %v2498
      %v2553 = vsub.f32 %v2245, %v2499
      %v2554 = vsub.f32 %v2258, %v2500
      %v2555 = vsub.f32 %v2271, %v2501
      %v2556 = vsub.f32 %v2284, %v2502
      %v2557 = vsub.f32 %v2297, %v2503
      %v2558 = vsub.f32 %v2310, %v2504
      %v2559 = vsub.f32 %v2323, %v2505
      %v2560 = vsub.f32 %v2336, %v2506
      %v2561 = vsub.f32 %v2349, %v2507
      %v2562 = vsub.f32 %v2362, %v2508
      %v2563 = vsub.f32 %v2375, %v2509
      %v2564 = vsub.f32 %v2388, %v2510
      %v2565 = vsub.f32 %v2401, %v2511
      %v2566 = vlaneseq
      %v2567 = vshrl.u32 %v2566, 7
      %vm2568 = vcmp.lt.s32.totalorder %v2567, 2
      %v2569 = vsel %vm2568, 1, 0
      %v2570 = vcvt.s32.f32 %v2569
      %v2571 = vmul.f32 %v2512, %v2512
      %v2572 = vmul.f32 %v2513, %v2513
      %v2573 = vmul.f32 %v2514, %v2514
      %v2574 = vmul.f32 %v2515, %v2515
      %v2575 = vmul.f32 %v2516, %v2516
      %v2576 = vmul.f32 %v2517, %v2517
      %v2577 = vmul.f32 %v2518, %v2518
      %v2578 = vmul.f32 %v2519, %v2519
      %v2579 = vmul.f32 %v2520, %v2520
      %v2580 = vmul.f32 %v2521, %v2521
      %v2581 = vmul.f32 %v2522, %v2522
      %v2582 = vmul.f32 %v2523, %v2523
      %v2583 = vmul.f32 %v2524, %v2524
      %v2584 = vmul.f32 %v2525, %v2525
      %v2585 = vmul.f32 %v2526, %v2526
      %v2586 = vmul.f32 %v2527, %v2527
      %v2587 = vmul.f32 %v2528, %v2528
      %v2588 = vmul.f32 %v2529, %v2529
      %v2589 = vmul.f32 %v2530, %v2530
      %v2590 = vmul.f32 %v2531, %v2531
      %v2591 = vmul.f32 %v2532, %v2532
      %v2592 = vmul.f32 %v2533, %v2533
      %v2593 = vmul.f32 %v2534, %v2534
      %v2594 = vmul.f32 %v2535, %v2535
      %v2595 = vmul.f32 %v2536, %v2536
      %v2596 = vmul.f32 %v2537, %v2537
      %v2597 = vmul.f32 %v2538, %v2538
      %v2598 = vmul.f32 %v2539, %v2539
      %v2599 = vmul.f32 %v2540, %v2540
      %v2600 = vmul.f32 %v2541, %v2541
      %v2601 = vmul.f32 %v2542, %v2542
      %v2602 = vmul.f32 %v2543, %v2543
      %v2603 = vmul.f32 %v2544, %v2544
      %v2604 = vmul.f32 %v2545, %v2545
      %v2605 = vmul.f32 %v2546, %v2546
      %v2606 = vmul.f32 %v2547, %v2547
      %v2607 = vmul.f32 %v2548, %v2548
      %v2608 = vmul.f32 %v2549, %v2549
      %v2609 = vmul.f32 %v2550, %v2550
      %v2610 = vmul.f32 %v2551, %v2551
      %v2611 = vmul.f32 %v2552, %v2552
      %v2612 = vmul.f32 %v2553, %v2553
      %v2613 = vmul.f32 %v2554, %v2554
      %v2614 = vmul.f32 %v2555, %v2555
      %v2615 = vmul.f32 %v2556, %v2556
      %v2616 = vmul.f32 %v2557, %v2557
      %v2617 = vmul.f32 %v2558, %v2558
      %v2618 = vmul.f32 %v2559, %v2559
      %v2619 = vmul.f32 %v2560, %v2560
      %v2620 = vmul.f32 %v2561, %v2561
      %v2621 = vmul.f32 %v2562, %v2562
      %v2622 = vmul.f32 %v2563, %v2563
      %v2623 = vmul.f32 %v2564, %v2564
      %v2624 = vmul.f32 %v2565, %v2565
      %v2625 = vadd.f32 %v2571, %v2572
      %v2626 = vadd.f32 %v2625, %v2573
      %v2627 = vadd.f32 %v2626, %v2574
      %v2628 = vadd.f32 %v2627, %v2575
      %v2629 = vadd.f32 %v2628, %v2576
      %v2630 = vadd.f32 %v2629, %v2577
      %v2631 = vadd.f32 %v2630, %v2578
      %v2632 = vadd.f32 %v2631, %v2579
      %v2633 = vadd.f32 %v2632, %v2580
      %v2634 = vadd.f32 %v2633, %v2581
      %v2635 = vadd.f32 %v2634, %v2582
      %v2636 = vadd.f32 %v2635, %v2583
      %v2637 = vadd.f32 %v2636, %v2584
      %v2638 = vadd.f32 %v2637, %v2585
      %v2639 = vadd.f32 %v2638, %v2586
      %v2640 = vadd.f32 %v2639, %v2587
      %v2641 = vadd.f32 %v2640, %v2588
      %v2642 = vadd.f32 %v2641, %v2589
      %v2643 = vadd.f32 %v2642, %v2590
      %v2644 = vadd.f32 %v2643, %v2591
      %v2645 = vadd.f32 %v2644, %v2592
      %v2646 = vadd.f32 %v2645, %v2593
      %v2647 = vadd.f32 %v2646, %v2594
      %v2648 = vadd.f32 %v2647, %v2595
      %v2649 = vadd.f32 %v2648, %v2596
      %v2650 = vadd.f32 %v2649, %v2597
      %v2651 = vadd.f32 %v2650, %v2598
      %v2652 = vadd.f32 %v2651, %v2599
      %v2653 = vadd.f32 %v2652, %v2600
      %v2654 = vadd.f32 %v2653, %v2601
      %v2655 = vadd.f32 %v2654, %v2602
      %v2656 = vadd.f32 %v2655, %v2603
      %v2657 = vadd.f32 %v2656, %v2604
      %v2658 = vadd.f32 %v2657, %v2605
      %v2659 = vadd.f32 %v2658, %v2606
      %v2660 = vadd.f32 %v2659, %v2607
      %v2661 = vadd.f32 %v2660, %v2608
      %v2662 = vadd.f32 %v2661, %v2609
      %v2663 = vadd.f32 %v2662, %v2610
      %v2664 = vadd.f32 %v2663, %v2611
      %v2665 = vadd.f32 %v2664, %v2612
      %v2666 = vadd.f32 %v2665, %v2613
      %v2667 = vadd.f32 %v2666, %v2614
      %v2668 = vadd.f32 %v2667, %v2615
      %v2669 = vadd.f32 %v2668, %v2616
      %v2670 = vadd.f32 %v2669, %v2617
      %v2671 = vadd.f32 %v2670, %v2618
      %v2672 = vadd.f32 %v2671, %v2619
      %v2673 = vadd.f32 %v2672, %v2620
      %v2674 = vadd.f32 %v2673, %v2621
      %v2675 = vadd.f32 %v2674, %v2622
      %v2676 = vadd.f32 %v2675, %v2623
      %v2677 = vadd.f32 %v2676, %v2624
      %2678 = vadd.xlane.f32.xlu0 %v2677
      %v2679 = vpop.xlane.xlu0 %2678
      %v2680 = vmul.f32 %v2679, %v2570
      %vm2681 = vcmask 7168
      %v2682 = vsel %vm2681, %v2680, 0.0
      %2683 = vadd.xlane.f32.xlu0 %v2682
      %v2684 = vpop.xlane.xlu0 %2683
      %v2685 = vrot.slane %v2684, 4
      %v2686 = vadd.f32 %v2684, %v2685
      %v2687 = vrot.slane %v2686, 2
      %v2688 = vadd.f32 %v2686, %v2687
      %v2689 = vrot.slane %v2688, 1
      %v2690 = vadd.f32 %v2688, %v2689
      %s2691 = vtos %v2690
      %v2692 = vstv %s2691
      %2693 = vst [vmem:[%s277] sm:$0xff] %v2692
      %s2694 = smul.u32 54, %s17
      %p2695 = scmp.lt.s32.totalorder %s2694, 215
      %s2696 = scalar_select %p2695, %s2694, 215
      %s2697 = smul.addr %s2696, 8
      %s2698 = scalar_lea.vmem %s4, %s2697
      %p2699 = scmp.lt.s32.totalorder %s17, 3
      %s2700 = scalar_select %p2699, %s17, 3
      %s2701 = smul.addr %s2700, 8
      %s2702 = scalar_lea.vmem %s5, %s2701
      // Predicated region
      $region37: #{encoder_vqvae_forward.3} parent=35 // pred_check
        %p2703 = pneg %p134
      $region38: #{encoder_vqvae_forward.3} parent=35 // pred_check_branch
        %2705 = sbr.rel (%p2703) target = $region40
      $region39: #{encoder_vqvae_forward.3} parent=35 // pred_region
        %s2706 = smul.u32 54, %s17
      $region40: #{encoder_vqvae_forward.3} parent=35 // pred_fallthru
        _
      // Predicated region
      $region41: #{encoder_vqvae_forward.3} parent=35 // pred_check
        %p2707 = pneg %p160
      $region42: #{encoder_vqvae_forward.3} parent=35 // pred_check_branch
        %2709 = sbr.rel (%p2707) target = $region44
      $region43: #{encoder_vqvae_forward.3} parent=35 // pred_region
        _
      $region44: #{encoder_vqvae_forward.3} parent=35 // pred_fallthru
        _
    $region36: #{encoder_vqvae_forward.3} parent=5 // pred_fallthru
      _
    %p2710 = scmp.le.s32.totalorder 2, %s12
    // Predicated region
    $region45: #{encoder_vqvae_forward.3} parent=5 // pred_check
      %p2711 = pneg %p2710
    $region46: #{encoder_vqvae_forward.3} parent=5 // pred_check_branch
      %2713 = sbr.rel (%p2711) target = $region48
    $region47: #{encoder_vqvae_forward.3} parent=5 // pred_region
      %s2714 = ssub.s32 %s12, 2
      // Predicated region
      $region49: #{encoder_vqvae_forward.3} parent=47 // pred_check
        %p2715 = pneg %p140
      $region50: #{encoder_vqvae_forward.3} parent=47 // pred_check_branch
        %2717 = sbr.rel (%p2715) target = $region52
      $region51: #{encoder_vqvae_forward.3} parent=47 // pred_region
        %s2718 = smul.u32 54, %s18
        %p2719 = scmp.lt.s32.totalorder %s2718, 215
        %s2720 = scalar_select %p2719, %s2718, 215
        %s2721 = smul.addr %s2720, 8
        %s2722 = scalar_lea.vmem %s4, %s2721
      $region52: #{encoder_vqvae_forward.3} parent=47 // pred_fallthru
        _
      // Predicated region
      $region53: #{encoder_vqvae_forward.3} parent=47 // pred_check
        %p2723 = pneg %p166
      $region54: #{encoder_vqvae_forward.3} parent=47 // pred_check_branch
        %2725 = sbr.rel (%p2723) target = $region56
      $region55: #{encoder_vqvae_forward.3} parent=47 // pred_region
        %p2726 = scmp.lt.s32.totalorder %s18, 3
        %s2727 = scalar_select %p2726, %s18, 3
        %s2728 = smul.addr %s2727, 8
        %s2729 = scalar_lea.vmem %s5, %s2728
      $region56: #{encoder_vqvae_forward.3} parent=47 // pred_fallthru
        _
    $region48: #{encoder_vqvae_forward.3} parent=5 // pred_fallthru
      _
  $region6: #{encoder_vqvae_forward.3} parent=0 // loop_footer
    %s16 = sadd.s32 1, %s12
  $region7: #{encoder_vqvae_forward.3} parent=0 // loop_footer_branch
    %11 = sbr.rel target = $region3
  $region8: #{encoder_vqvae_forward.3} parent=0 // loop_exit
    _

</llo_original>
